<compile_context>
chip_gen: v6e
topology: v6e:2x2x1
jax: 0.10.0
libtpu: 0.0.40
codegen_flags: <defaults>
</compile_context>

<pallas_src>
import functools

import jax
import jax.numpy as jnp
from jax.experimental import pallas as pl
from jax.experimental.pallas import tpu as pltpu

# ----------------------------- configuration -------------------------------
IN_CHANNELS = 32          # C
PROCESSING_STEPS = 3
NUM_LAYERS = 1            # TODO(synk): only num_layers=1 (the default) is implemented.
BATCH = 2
JOB_SIZE = 8
NEG_SLOPE = 0.01          # F.leaky_relu default
BATCH_TILE = 8            # sublane-filling batch tile per grid step


def _round_up(n, m):
    return (n + m - 1) // m * m


# ------------------------------- kernel ------------------------------------
def set2set_kernel(x_ref, w_ref, o_ref, *, steps, C):
    x = x_ref[...]                                  # (Bt, J, C) f32
    Bt, J, _ = x.shape
    C4 = 4 * C

    # Static, sublane-aligned slices of the packed parameter buffer.
    w_comb = w_ref[0:C, :]                          # (C, 4C) = W_ih[:, :C].T + W_hh.T
    w_ih_r = w_ref[C:2 * C, :]                      # (C, 4C) = W_ih[:, C:].T
    b_lstm = w_ref[2 * C:2 * C + 1, :]              # (1, 4C) = b_ih + b_hh
    mlp0 = 2 * C + 8
    w_mlp_x = w_ref[mlp0:mlp0 + C, 0:C]             # (C, C)   x-half of mlp.weight.T
    w_mlp_h = w_ref[mlp0 + C:mlp0 + 2 * C, 0:C]     # (C, C)   q-half
    w_mlp_r = w_ref[mlp0 + 2 * C:mlp0 + 3 * C, 0:C] # (C, C)   r-half
    b_mlp = w_ref[mlp0 + 3 * C:mlp0 + 3 * C + 1, 0:C]   # (1, C)

    h = jnp.zeros((Bt, C), jnp.float32)
    c = jnp.zeros((Bt, C), jnp.float32)
    r = jnp.zeros((Bt, C), jnp.float32)

    # processing_steps is small and static -> unrolled Python loop.
    for step in range(steps):
        # ---- single-timestep LSTM cell (PyTorch gate order: i, f, g, o) ----
        if step == 0:
            # h == c == q_star == 0 at step 0 -> gates are just the bias.
            gates = jnp.broadcast_to(b_lstm, (Bt, C4))
        else:
            # q_star = [q, r] with q == h, so fold the q-half of W_ih into W_hh.
            gates = (jnp.dot(h, w_comb, preferred_element_type=jnp.float32)
                     + jnp.dot(r, w_ih_r, preferred_element_type=jnp.float32)
                     + b_lstm)                               # (Bt, 4C)
        i_g = jax.nn.sigmoid(gates[:, 0:C])
        f_g = jax.nn.sigmoid(gates[:, C:2 * C])
        g_g = jnp.tanh(gates[:, 2 * C:3 * C])
        o_g = jax.nn.sigmoid(gates[:, 3 * C:4 * C])
        c = i_g * g_g if step == 0 else f_g * c + i_g * g_g
        h = o_g * jnp.tanh(c)                                # q == h

        # ---- attention over the job axis (VPU + XLU; too small for MXU) ----
        e = jnp.sum(x * h[:, None, :], axis=2)               # (Bt, J)
        e = e - jnp.max(e, axis=1, keepdims=True)
        a = jnp.exp(e)
        a = a * pl.reciprocal(jnp.sum(a, axis=1, keepdims=True))   # softmax(dim=1)
        r = jnp.sum(a[:, :, None] * x, axis=1)               # (Bt, C)

    # ---- final Linear + leaky_relu, split so no (Bt, J, 3C) tensor exists ----
    out_x = jax.lax.dot_general(
        x, w_mlp_x, dimension_numbers=(((2,), (0,)), ((), ())),
        preferred_element_type=jnp.float32)                  # (Bt, J, C)
    out_q = (jnp.dot(h, w_mlp_h, preferred_element_type=jnp.float32)
             + jnp.dot(r, w_mlp_r, preferred_element_type=jnp.float32)
             + b_mlp)                                        # (Bt, C)
    out = out_x + out_q[:, None, :]
    out = jnp.where(out >= 0, out, NEG_SLOPE * out)          # leaky_relu
    o_ref[...] = out.astype(o_ref.dtype)


# --------------------------- parameter packing -------------------------------
def pack_params(params, C):
    """Pack all weights/biases into one (5C+16, 4C) f32 buffer, 8-row aligned."""
    w_ih, w_hh, b_ih, b_hh, w_mlp, b_mlp = params
    assert C % 8 == 0, "in_channels must be a multiple of 8 for this packing"

    w_ih_t = w_ih.T                       # (2C, 4C)
    w_hh_t = w_hh.T                       # (C, 4C)
    w_comb = w_ih_t[:C] + w_hh_t          # (C, 4C)  q == h folding
    w_ih_r = w_ih_t[C:]                   # (C, 4C)
    b_lstm = (b_ih + b_hh)[None, :]       # (1, 4C)
    w_mlp_t = w_mlp.T                     # (3C, C)
    lane = 4 * C

    def seg(a, rows=None):
        rows = a.shape[0] if rows is None else rows
        return jnp.pad(a, ((0, rows - a.shape[0]), (0, lane - a.shape[1])))

    return jnp.concatenate([
        seg(w_comb),                # rows 0      : C
        seg(w_ih_r),                # rows C      : 2C
        seg(b_lstm, 8),             # rows 2C     : 2C+8
        seg(w_mlp_t),               # rows 2C+8   : 5C+8
        seg(b_mlp[None, :], 8),     # rows 5C+8   : 5C+16
    ], axis=0).astype(jnp.float32)


# ------------------------------- wrapper ------------------------------------
def set2set_forward(x, params, *, steps=PROCESSING_STEPS, batch_tile=BATCH_TILE):
    B, J, C = x.shape
    wpack = pack_params(params, C)

    # Pad batch to a multiple of batch_tile (>= 8 fills all vreg sublanes);
    # padded rows are zeros -> softmax stays finite, results are sliced away.
    Bp = _round_up(max(B, batch_tile), batch_tile)
    x_p = jnp.pad(x, ((0, Bp - B), (0, 0), (0, 0)))

    out = pl.pallas_call(
        functools.partial(set2set_kernel, steps=steps, C=C),
        out_shape=jax.ShapeDtypeStruct((Bp, J, C), jnp.float32),
        grid=(Bp // batch_tile,),
        in_specs=[
            pl.BlockSpec((batch_tile, J, C), lambda b: (b, 0, 0)),
            pl.BlockSpec(wpack.shape, lambda b: (0, 0)),
        ],
        out_specs=pl.BlockSpec((batch_tile, J, C), lambda b: (b, 0, 0)),
        compiler_params=pltpu.CompilerParams(
            dimension_semantics=("parallel",)),
    )(x_p, wpack)
    return out[:B]


# --------------------------- deterministic init ------------------------------
def init_params(key, c):
    k_lstm = 1.0 / jnp.sqrt(c)
    k_mlp = 1.0 / jnp.sqrt(3 * c)
    ks = jax.random.split(key, 6)
    w_ih = jax.random.uniform(ks[0], (4 * c, 2 * c), jnp.float32, -k_lstm, k_lstm)
    w_hh = jax.random.uniform(ks[1], (4 * c, c), jnp.float32, -k_lstm, k_lstm)
    b_ih = jax.random.uniform(ks[2], (4 * c,), jnp.float32, -k_lstm, k_lstm)
    b_hh = jax.random.uniform(ks[3], (4 * c,), jnp.float32, -k_lstm, k_lstm)
    w_mlp = jax.random.uniform(ks[4], (c, 3 * c), jnp.float32, -k_mlp, k_mlp)
    b_mlp = jax.random.uniform(ks[5], (c,), jnp.float32, -k_mlp, k_mlp)
    return (w_ih, w_hh, b_ih, b_hh, w_mlp, b_mlp)


# --------------------------- pure-JAX reference ------------------------------
def set2set_ref(x, params, *, steps=PROCESSING_STEPS):
    B, J, C = x.shape
    w_ih, w_hh, b_ih, b_hh, w_mlp, b_mlp = params
    h = jnp.zeros((B, C), jnp.float32)
    c = jnp.zeros((B, C), jnp.float32)
    q_star = jnp.zeros((B, 2 * C), jnp.float32)
    for _ in range(steps):
        gates = q_star @ w_ih.T + h @ w_hh.T + b_ih + b_hh
        i_g = jax.nn.sigmoid(gates[:, 0:C])
        f_g = jax.nn.sigmoid(gates[:, C:2 * C])
        g_g = jnp.tanh(gates[:, 2 * C:3 * C])
        o_g = jax.nn.sigmoid(gates[:, 3 * C:4 * C])
        c = f_g * c + i_g * g_g
        h = o_g * jnp.tanh(c)
        q = h
        e = jnp.sum(x * q[:, None, :], axis=2)
        a = jax.nn.softmax(e, axis=1)
        r = jnp.sum(a[:, :, None] * x, axis=1)
        q_star = jnp.concatenate([q, r], axis=-1)
    feat = jnp.concatenate(
        [x, jnp.broadcast_to(q_star[:, None, :], (B, J, 2 * C))], axis=2)
    out = feat @ w_mlp.T + b_mlp
    return jnp.where(out >= 0, out, NEG_SLOPE * out)


# ---------------------------------- main -------------------------------------
if __name__ == "__main__":
    key = jax.random.PRNGKey(0)
    k_x, k_p, k_x2 = jax.random.split(key, 3)
    params = init_params(k_p, IN_CHANNELS)

    # Module-sized input (batch=2): wrapper pads the batch to one 8-row tile.
    x = jax.random.normal(k_x, (BATCH, JOB_SIZE, IN_CHANNELS), jnp.float32)
    out = jax.block_until_ready(set2set_forward(x, params))
    ref = set2set_ref(x, params)
    assert out.shape == (BATCH, JOB_SIZE, IN_CHANNELS)
    assert jnp.allclose(out, ref, atol=1e-4, rtol=1e-4), \
        float(jnp.max(jnp.abs(out - ref)))

    # Batched path: grid=(2,) over the batch tiles (exercises the parallel axis).
    x_big = jax.random.normal(k_x2, (16, JOB_SIZE, IN_CHANNELS), jnp.float32)
    out_big = jax.block_until_ready(set2set_forward(x_big, params))
    ref_big = set2set_ref(x_big, params)
    assert jnp.allclose(out_big, ref_big, atol=1e-4, rtol=1e-4), \
        float(jnp.max(jnp.abs(out_big - ref_big)))

    print("KERNEL_OK")
</pallas_src>

<mosaic_0001>
module attributes {stable_mosaic.version = 11 : i64} {
  func.func @set2set_kernel(%arg0: i32, %arg1: memref<8x8x32xf32, #tpu.memory_space<vmem>>, %arg2: memref<176x128xf32, #tpu.memory_space<vmem>>, %arg3: memref<8x8x32xf32, #tpu.memory_space<vmem>>) attributes {dimension_semantics = [#tpu.dimension_semantics<parallel>], iteration_bounds = array<i64: 1>, scalar_prefetch = 0 : i64, scratch_operands = 0 : i64, tpu.core_type = #tpu.core_type<tc>, window_params = [{transform_indices = @transform_0, window_bounds = array<i64: 8, 8, 32>}, {pipeline_mode = #tpu.pipeline_mode<synchronous>, transform_indices = @transform_1, window_bounds = array<i64: 176, 128>}, {transform_indices = @transform_2, window_bounds = array<i64: 8, 8, 32>}]} {
    %c0 = arith.constant 0 : index
    %c0_0 = arith.constant 0 : index
    %c0_1 = arith.constant 0 : index
    %0 = vector.load %arg1[%c0, %c0_0, %c0_1] : memref<8x8x32xf32, #tpu.memory_space<vmem>>, vector<8x8x32xf32>
    %c0_2 = arith.constant 0 : index
    %c0_3 = arith.constant 0 : index
    %1 = vector.load %arg2[%c0_2, %c0_3] : memref<176x128xf32, #tpu.memory_space<vmem>>, vector<32x128xf32>
    %c32 = arith.constant 32 : index
    %c0_4 = arith.constant 0 : index
    %2 = vector.load %arg2[%c32, %c0_4] : memref<176x128xf32, #tpu.memory_space<vmem>>, vector<32x128xf32>
    %c64 = arith.constant 64 : index
    %c0_5 = arith.constant 0 : index
    %3 = vector.load %arg2[%c64, %c0_5] : memref<176x128xf32, #tpu.memory_space<vmem>>, vector<1x128xf32>
    %c72 = arith.constant 72 : index
    %c0_6 = arith.constant 0 : index
    %4 = vector.load %arg2[%c72, %c0_6] : memref<176x128xf32, #tpu.memory_space<vmem>>, vector<32x32xf32>
    %c104 = arith.constant 104 : index
    %c0_7 = arith.constant 0 : index
    %5 = vector.load %arg2[%c104, %c0_7] : memref<176x128xf32, #tpu.memory_space<vmem>>, vector<32x32xf32>
    %c136 = arith.constant 136 : index
    %c0_8 = arith.constant 0 : index
    %6 = vector.load %arg2[%c136, %c0_8] : memref<176x128xf32, #tpu.memory_space<vmem>>, vector<32x32xf32>
    %c168 = arith.constant 168 : index
    %c0_9 = arith.constant 0 : index
    %7 = vector.load %arg2[%c168, %c0_9] : memref<176x128xf32, #tpu.memory_space<vmem>>, vector<1x32xf32>
    %8 = vector.shape_cast %3 : vector<1x128xf32> to vector<1x128xf32>
    %9 = vector.broadcast %8 : vector<1x128xf32> to vector<8x128xf32>
    %10 = vector.extract_strided_slice %9 {offsets = [0, 0], sizes = [8, 32], strides = [1, 1]} : vector<8x128xf32> to vector<8x32xf32>
    %11 = arith.negf %10 : vector<8x32xf32>
    %12 = math.exp %11 : vector<8x32xf32>
    %cst = arith.constant 1.000000e+00 : f32
    %13 = vector.broadcast %cst : f32 to vector<8x32xf32>
    %14 = arith.addf %13, %12 : vector<8x32xf32>
    %15 = arith.divf %13, %14 : vector<8x32xf32>
    %16 = vector.extract_strided_slice %9 {offsets = [0, 64], sizes = [8, 32], strides = [1, 1]} : vector<8x128xf32> to vector<8x32xf32>
    %17 = math.tanh %16 : vector<8x32xf32>
    %18 = vector.extract_strided_slice %9 {offsets = [0, 96], sizes = [8, 32], strides = [1, 1]} : vector<8x128xf32> to vector<8x32xf32>
    %19 = arith.negf %18 : vector<8x32xf32>
    %20 = math.exp %19 : vector<8x32xf32>
    %cst_10 = arith.constant 1.000000e+00 : f32
    %21 = vector.broadcast %cst_10 : f32 to vector<8x32xf32>
    %22 = arith.addf %21, %20 : vector<8x32xf32>
    %23 = arith.divf %21, %22 : vector<8x32xf32>
    %24 = arith.mulf %15, %17 : vector<8x32xf32>
    %25 = math.tanh %24 : vector<8x32xf32>
    %26 = arith.mulf %23, %25 : vector<8x32xf32>
    %27 = vector.shape_cast %26 : vector<8x32xf32> to vector<8x1x32xf32>
    %28 = vector.broadcast %27 : vector<8x1x32xf32> to vector<8x8x32xf32>
    %29 = arith.mulf %0, %28 : vector<8x8x32xf32>
    %cst_11 = arith.constant dense<0.000000e+00> : vector<8x8xf32>
    %30 = vector.multi_reduction <add>, %29, %cst_11 [2] : vector<8x8x32xf32> to vector<8x8xf32>
    %cst_12 = arith.constant dense<0xFF800000> : vector<8xf32>
    %31 = vector.multi_reduction <maximumf>, %30, %cst_12 [1] : vector<8x8xf32> to vector<8xf32>
    %32 = vector.shape_cast %31 : vector<8xf32> to vector<8x1xf32>
    %33 = vector.broadcast %32 : vector<8x1xf32> to vector<8x8xf32>
    %34 = arith.subf %30, %33 : vector<8x8xf32>
    %35 = math.exp %34 : vector<8x8xf32>
    %cst_13 = arith.constant dense<0.000000e+00> : vector<8xf32>
    %36 = vector.multi_reduction <add>, %35, %cst_13 [1] : vector<8x8xf32> to vector<8xf32>
    %37 = vector.shape_cast %36 : vector<8xf32> to vector<8x1xf32>
    %38 = tpu.reciprocal %37 : vector<8x1xf32> -> vector<8x1xf32>
    %39 = vector.broadcast %38 : vector<8x1xf32> to vector<8x8xf32>
    %40 = arith.mulf %35, %39 : vector<8x8xf32>
    %41 = vector.shape_cast %40 : vector<8x8xf32> to vector<8x8x1xf32>
    %42 = vector.broadcast %41 : vector<8x8x1xf32> to vector<8x8x32xf32>
    %43 = arith.mulf %42, %0 : vector<8x8x32xf32>
    %cst_14 = arith.constant dense<0.000000e+00> : vector<8x32xf32>
    %44 = vector.multi_reduction <add>, %43, %cst_14 [1] : vector<8x8x32xf32> to vector<8x32xf32>
    %cst_15 = arith.constant dense<0.000000e+00> : vector<8x128xf32>
    %45 = tpu.matmul %26, %1, %cst_15 {dimension_numbers = #tpu.dot_dimension_numbers<[1], [0], [0], [1], [0, 0, 1, 1], [], []>} : vector<8x32xf32>, vector<32x128xf32>, vector<8x128xf32> -> vector<8x128xf32>
    %cst_16 = arith.constant dense<0.000000e+00> : vector<8x128xf32>
    %46 = tpu.matmul %44, %2, %cst_16 {dimension_numbers = #tpu.dot_dimension_numbers<[1], [0], [0], [1], [0, 0, 1, 1], [], []>} : vector<8x32xf32>, vector<32x128xf32>, vector<8x128xf32> -> vector<8x128xf32>
    %47 = arith.addf %45, %46 : vector<8x128xf32>
    %48 = vector.broadcast %3 : vector<1x128xf32> to vector<8x128xf32>
    %49 = arith.addf %47, %48 : vector<8x128xf32>
    %50 = vector.extract_strided_slice %49 {offsets = [0, 0], sizes = [8, 32], strides = [1, 1]} : vector<8x128xf32> to vector<8x32xf32>
    %51 = arith.negf %50 : vector<8x32xf32>
    %52 = math.exp %51 : vector<8x32xf32>
    %cst_17 = arith.constant 1.000000e+00 : f32
    %53 = vector.broadcast %cst_17 : f32 to vector<8x32xf32>
    %54 = arith.addf %53, %52 : vector<8x32xf32>
    %55 = arith.divf %53, %54 : vector<8x32xf32>
    %56 = vector.extract_strided_slice %49 {offsets = [0, 32], sizes = [8, 32], strides = [1, 1]} : vector<8x128xf32> to vector<8x32xf32>
    %57 = arith.negf %56 : vector<8x32xf32>
    %58 = math.exp %57 : vector<8x32xf32>
    %cst_18 = arith.constant 1.000000e+00 : f32
    %59 = vector.broadcast %cst_18 : f32 to vector<8x32xf32>
    %60 = arith.addf %59, %58 : vector<8x32xf32>
    %61 = arith.divf %59, %60 : vector<8x32xf32>
    %62 = vector.extract_strided_slice %49 {offsets = [0, 64], sizes = [8, 32], strides = [1, 1]} : vector<8x128xf32> to vector<8x32xf32>
    %63 = math.tanh %62 : vector<8x32xf32>
    %64 = vector.extract_strided_slice %49 {offsets = [0, 96], sizes = [8, 32], strides = [1, 1]} : vector<8x128xf32> to vector<8x32xf32>
    %65 = arith.negf %64 : vector<8x32xf32>
    %66 = math.exp %65 : vector<8x32xf32>
    %cst_19 = arith.constant 1.000000e+00 : f32
    %67 = vector.broadcast %cst_19 : f32 to vector<8x32xf32>
    %68 = arith.addf %67, %66 : vector<8x32xf32>
    %69 = arith.divf %67, %68 : vector<8x32xf32>
    %70 = arith.mulf %61, %24 : vector<8x32xf32>
    %71 = arith.mulf %55, %63 : vector<8x32xf32>
    %72 = arith.addf %70, %71 : vector<8x32xf32>
    %73 = math.tanh %72 : vector<8x32xf32>
    %74 = arith.mulf %69, %73 : vector<8x32xf32>
    %75 = vector.shape_cast %74 : vector<8x32xf32> to vector<8x1x32xf32>
    %76 = vector.broadcast %75 : vector<8x1x32xf32> to vector<8x8x32xf32>
    %77 = arith.mulf %0, %76 : vector<8x8x32xf32>
    %cst_20 = arith.constant dense<0.000000e+00> : vector<8x8xf32>
    %78 = vector.multi_reduction <add>, %77, %cst_20 [2] : vector<8x8x32xf32> to vector<8x8xf32>
    %cst_21 = arith.constant dense<0xFF800000> : vector<8xf32>
    %79 = vector.multi_reduction <maximumf>, %78, %cst_21 [1] : vector<8x8xf32> to vector<8xf32>
    %80 = vector.shape_cast %79 : vector<8xf32> to vector<8x1xf32>
    %81 = vector.broadcast %80 : vector<8x1xf32> to vector<8x8xf32>
    %82 = arith.subf %78, %81 : vector<8x8xf32>
    %83 = math.exp %82 : vector<8x8xf32>
    %cst_22 = arith.constant dense<0.000000e+00> : vector<8xf32>
    %84 = vector.multi_reduction <add>, %83, %cst_22 [1] : vector<8x8xf32> to vector<8xf32>
    %85 = vector.shape_cast %84 : vector<8xf32> to vector<8x1xf32>
    %86 = tpu.reciprocal %85 : vector<8x1xf32> -> vector<8x1xf32>
    %87 = vector.broadcast %86 : vector<8x1xf32> to vector<8x8xf32>
    %88 = arith.mulf %83, %87 : vector<8x8xf32>
    %89 = vector.shape_cast %88 : vector<8x8xf32> to vector<8x8x1xf32>
    %90 = vector.broadcast %89 : vector<8x8x1xf32> to vector<8x8x32xf32>
    %91 = arith.mulf %90, %0 : vector<8x8x32xf32>
    %cst_23 = arith.constant dense<0.000000e+00> : vector<8x32xf32>
    %92 = vector.multi_reduction <add>, %91, %cst_23 [1] : vector<8x8x32xf32> to vector<8x32xf32>
    %cst_24 = arith.constant dense<0.000000e+00> : vector<8x128xf32>
    %93 = tpu.matmul %74, %1, %cst_24 {dimension_numbers = #tpu.dot_dimension_numbers<[1], [0], [0], [1], [0, 0, 1, 1], [], []>} : vector<8x32xf32>, vector<32x128xf32>, vector<8x128xf32> -> vector<8x128xf32>
    %cst_25 = arith.constant dense<0.000000e+00> : vector<8x128xf32>
    %94 = tpu.matmul %92, %2, %cst_25 {dimension_numbers = #tpu.dot_dimension_numbers<[1], [0], [0], [1], [0, 0, 1, 1], [], []>} : vector<8x32xf32>, vector<32x128xf32>, vector<8x128xf32> -> vector<8x128xf32>
    %95 = arith.addf %93, %94 : vector<8x128xf32>
    %96 = vector.broadcast %3 : vector<1x128xf32> to vector<8x128xf32>
    %97 = arith.addf %95, %96 : vector<8x128xf32>
    %98 = vector.extract_strided_slice %97 {offsets = [0, 0], sizes = [8, 32], strides = [1, 1]} : vector<8x128xf32> to vector<8x32xf32>
    %99 = arith.negf %98 : vector<8x32xf32>
    %100 = math.exp %99 : vector<8x32xf32>
    %cst_26 = arith.constant 1.000000e+00 : f32
    %101 = vector.broadcast %cst_26 : f32 to vector<8x32xf32>
    %102 = arith.addf %101, %100 : vector<8x32xf32>
    %103 = arith.divf %101, %102 : vector<8x32xf32>
    %104 = vector.extract_strided_slice %97 {offsets = [0, 32], sizes = [8, 32], strides = [1, 1]} : vector<8x128xf32> to vector<8x32xf32>
    %105 = arith.negf %104 : vector<8x32xf32>
    %106 = math.exp %105 : vector<8x32xf32>
    %cst_27 = arith.constant 1.000000e+00 : f32
    %107 = vector.broadcast %cst_27 : f32 to vector<8x32xf32>
    %108 = arith.addf %107, %106 : vector<8x32xf32>
    %109 = arith.divf %107, %108 : vector<8x32xf32>
    %110 = vector.extract_strided_slice %97 {offsets = [0, 64], sizes = [8, 32], strides = [1, 1]} : vector<8x128xf32> to vector<8x32xf32>
    %111 = math.tanh %110 : vector<8x32xf32>
    %112 = vector.extract_strided_slice %97 {offsets = [0, 96], sizes = [8, 32], strides = [1, 1]} : vector<8x128xf32> to vector<8x32xf32>
    %113 = arith.negf %112 : vector<8x32xf32>
    %114 = math.exp %113 : vector<8x32xf32>
    %cst_28 = arith.constant 1.000000e+00 : f32
    %115 = vector.broadcast %cst_28 : f32 to vector<8x32xf32>
    %116 = arith.addf %115, %114 : vector<8x32xf32>
    %117 = arith.divf %115, %116 : vector<8x32xf32>
    %118 = arith.mulf %109, %72 : vector<8x32xf32>
    %119 = arith.mulf %103, %111 : vector<8x32xf32>
    %120 = arith.addf %118, %119 : vector<8x32xf32>
    %121 = math.tanh %120 : vector<8x32xf32>
    %122 = arith.mulf %117, %121 : vector<8x32xf32>
    %123 = vector.shape_cast %122 : vector<8x32xf32> to vector<8x1x32xf32>
    %124 = vector.broadcast %123 : vector<8x1x32xf32> to vector<8x8x32xf32>
    %125 = arith.mulf %0, %124 : vector<8x8x32xf32>
    %cst_29 = arith.constant dense<0.000000e+00> : vector<8x8xf32>
    %126 = vector.multi_reduction <add>, %125, %cst_29 [2] : vector<8x8x32xf32> to vector<8x8xf32>
    %cst_30 = arith.constant dense<0xFF800000> : vector<8xf32>
    %127 = vector.multi_reduction <maximumf>, %126, %cst_30 [1] : vector<8x8xf32> to vector<8xf32>
    %128 = vector.shape_cast %127 : vector<8xf32> to vector<8x1xf32>
    %129 = vector.broadcast %128 : vector<8x1xf32> to vector<8x8xf32>
    %130 = arith.subf %126, %129 : vector<8x8xf32>
    %131 = math.exp %130 : vector<8x8xf32>
    %cst_31 = arith.constant dense<0.000000e+00> : vector<8xf32>
    %132 = vector.multi_reduction <add>, %131, %cst_31 [1] : vector<8x8xf32> to vector<8xf32>
    %133 = vector.shape_cast %132 : vector<8xf32> to vector<8x1xf32>
    %134 = tpu.reciprocal %133 : vector<8x1xf32> -> vector<8x1xf32>
    %135 = vector.broadcast %134 : vector<8x1xf32> to vector<8x8xf32>
    %136 = arith.mulf %131, %135 : vector<8x8xf32>
    %137 = vector.shape_cast %136 : vector<8x8xf32> to vector<8x8x1xf32>
    %138 = vector.broadcast %137 : vector<8x8x1xf32> to vector<8x8x32xf32>
    %139 = arith.mulf %138, %0 : vector<8x8x32xf32>
    %cst_32 = arith.constant dense<0.000000e+00> : vector<8x32xf32>
    %140 = vector.multi_reduction <add>, %139, %cst_32 [1] : vector<8x8x32xf32> to vector<8x32xf32>
    %cst_33 = arith.constant dense<0.000000e+00> : vector<8x8x32xf32>
    %141 = tpu.matmul %0, %4, %cst_33 {dimension_numbers = #tpu.dot_dimension_numbers<[2], [0], [0, 1], [1], [0, 0, 0, 1, 1, 1], [], []>} : vector<8x8x32xf32>, vector<32x32xf32>, vector<8x8x32xf32> -> vector<8x8x32xf32>
    %cst_34 = arith.constant dense<0.000000e+00> : vector<8x32xf32>
    %142 = tpu.matmul %122, %5, %cst_34 {dimension_numbers = #tpu.dot_dimension_numbers<[1], [0], [0], [1], [0, 0, 1, 1], [], []>} : vector<8x32xf32>, vector<32x32xf32>, vector<8x32xf32> -> vector<8x32xf32>
    %cst_35 = arith.constant dense<0.000000e+00> : vector<8x32xf32>
    %143 = tpu.matmul %140, %6, %cst_35 {dimension_numbers = #tpu.dot_dimension_numbers<[1], [0], [0], [1], [0, 0, 1, 1], [], []>} : vector<8x32xf32>, vector<32x32xf32>, vector<8x32xf32> -> vector<8x32xf32>
    %144 = arith.addf %142, %143 : vector<8x32xf32>
    %145 = vector.broadcast %7 : vector<1x32xf32> to vector<8x32xf32>
    %146 = arith.addf %144, %145 : vector<8x32xf32>
    %147 = vector.shape_cast %146 : vector<8x32xf32> to vector<8x1x32xf32>
    %148 = vector.broadcast %147 : vector<8x1x32xf32> to vector<8x8x32xf32>
    %149 = arith.addf %141, %148 : vector<8x8x32xf32>
    %cst_36 = arith.constant 0.000000e+00 : f32
    %150 = vector.broadcast %cst_36 : f32 to vector<8x8x32xf32>
    %151 = arith.cmpf oge, %149, %150 : vector<8x8x32xf32>
    %cst_37 = arith.constant 0.00999999977 : f32
    %152 = vector.broadcast %cst_37 : f32 to vector<8x8x32xf32>
    %153 = arith.mulf %152, %149 : vector<8x8x32xf32>
    %154 = arith.select %151, %149, %153 : vector<8x8x32xi1>, vector<8x8x32xf32>
    %c0_38 = arith.constant 0 : index
    %c0_39 = arith.constant 0 : index
    %c0_40 = arith.constant 0 : index
    %155 = vector.load %arg3[%c0_38, %c0_39, %c0_40] : memref<8x8x32xf32, #tpu.memory_space<vmem>>, vector<8x8x32xf32>
    tpu.vector_store %arg3[%c0_38, %c0_39, %c0_40], %154 {strides = array<i32>} : memref<8x8x32xf32, #tpu.memory_space<vmem>>, vector<8x8x32xf32>,
    return
  }
  func.func @transform_0(%arg0: i32) -> (i32, i32, i32) {
    %c0_i32 = arith.constant 0 : i32
    %c0_i32_0 = arith.constant 0 : i32
    %c0_i32_1 = arith.constant 0 : i32
    return %arg0, %c0_i32, %c0_i32_0 : i32, i32, i32
  }
  func.func @transform_1(%arg0: i32) -> (i32, i32) {
    %c0_i32 = arith.constant 0 : i32
    %c0_i32_0 = arith.constant 0 : i32
    %c0_i32_1 = arith.constant 0 : i32
    return %c0_i32, %c0_i32_0 : i32, i32
  }
  func.func @transform_2(%arg0: i32) -> (i32, i32, i32) {
    %c0_i32 = arith.constant 0 : i32
    %c0_i32_0 = arith.constant 0 : i32
    %c0_i32_1 = arith.constant 0 : i32
    return %arg0, %c0_i32, %c0_i32_0 : i32, i32, i32
  }
}

</mosaic_0001>

<llo_original>
// kernel: tpu_custom_call.1
$region0: #{tpu_custom_call.1}
  #allocation0 [shape = 'u32[]', space=smem, size = 0x4, offset = 0x4, fixed_abs, tag = 'smem constant byte address 0x4 - core index']
  #allocation1 [shape = 'u32[144,128]{1,0:T(1,128)}', space=vmem, size = 0x12000, scoped, tag = 'internal scratch']
  %s0 = inlined_call_operand.hbm [shape: f32[8,8,32], index: 0, kind: input, shape index: {}]
  %s1 = inlined_call_operand.hbm [shape: f32[176,128], index: 1, kind: input, shape index: {}]
  %s2 = inlined_call_operand.hbm [shape: f32[8,8,32], index: 2, kind: output, shape index: {}]
  %s3 = sld [smem:[#allocation0]]
  $region26: #{tpu_custom_call.1} parent=0
    _
  %s5 = ssub.s32 1, %s3
  %s6 = scalar_select 0, %s5, %s3
  $region1: #{tpu_custom_call.1} parent=0
    #allocation2 [shape = 'u8[32768]{0}', space=vmem, size = 0x8000, scoped, tag = 'input window, operand 0, single buffered']
    #allocation3 [shape = 's32[1]{0}', space=sflag, size = 0x4, scoped, tag = 'scoped memory for tpu_custom_call.1']
    #allocation4 [shape = 's32[1]{0}', space=sflag, size = 0x4, scoped, tag = 'scoped memory for tpu_custom_call.1']
    #allocation5 [shape = 'u8[90112]{0}', space=vmem, size = 0x16000, scoped, tag = 'input window, operand 1, single buffered']
    #allocation6 [shape = 's32[1]{0}', space=sflag, size = 0x4, scoped, tag = 'scoped memory for tpu_custom_call.1']
    #allocation7 [shape = 'u8[32768]{0}', space=vmem, size = 0x8000, scoped, tag = 'output window, operand 0, single buffered']
    %7 = vsyncpa [#allocation3], 0
    %8 = vsyncpa [#allocation6], 0
    %9 = vsyncpa [#allocation4], 0
    // Predicated region
    $region2: #{tpu_custom_call.1} parent=1 // pred_check
      _
    $region3: #{tpu_custom_call.1} parent=1 // pred_check_branch
      %11 = sbr.rel (0) target = $region5
    $region4: #{tpu_custom_call.1} parent=1 // pred_region
      %s13 = ssub.s32 1024, 1024
      %14 = vsyncadd [#allocation3], %s13
      %s15 = sshll.u32 [#allocation2], 4
      %s16 = int_to_ptr.vmem [resolvable:$true] %s15
      %21 = dma.hbm_to_vmem [thread:$0]  %s0, 1024, %s16, [#allocation3], 128, 128, 8
    $region5: #{tpu_custom_call.1} parent=1 // pred_fallthru
      _
    // Predicated region
    $region6: #{tpu_custom_call.1} parent=1 // pred_check
      _
    $region7: #{tpu_custom_call.1} parent=1 // pred_check_branch
      %23 = sbr.rel (0) target = $region9
    $region8: #{tpu_custom_call.1} parent=1 // pred_region
      %s25 = ssub.s32 2816, 2816
      %26 = vsyncadd [#allocation6], %s25
      %s27 = sshll.u32 [#allocation5], 4
      %s28 = int_to_ptr.vmem [resolvable:$true] %s27
      %33 = dma.hbm_to_vmem [thread:$0]  %s1, 2816, %s28, [#allocation6], 128, 128, 8
    $region9: #{tpu_custom_call.1} parent=1 // pred_fallthru
      _
    // Predicated region
    $region10: #{tpu_custom_call.1} parent=1 // pred_check
      _
    $region11: #{tpu_custom_call.1} parent=1 // pred_check_branch
      %35 = sbr.rel (0) target = $region13
    $region12: #{tpu_custom_call.1} parent=1 // pred_region
      %36 = dma.done [#allocation3], 1024
    $region13: #{tpu_custom_call.1} parent=1 // pred_fallthru
      _
    // Predicated region
    $region14: #{tpu_custom_call.1} parent=1 // pred_check
      _
    $region15: #{tpu_custom_call.1} parent=1 // pred_check_branch
      %38 = sbr.rel (0) target = $region17
    $region16: #{tpu_custom_call.1} parent=1 // pred_region
      %39 = dma.done [#allocation6], 2816
    $region17: #{tpu_custom_call.1} parent=1 // pred_fallthru
      _
    %v40 = vld [vmem:[#allocation2] sm:$0xff]
    %v41 = vld [vmem:[#allocation2 + $0x8] sm:$0xff]
    %v42 = vld [vmem:[#allocation2 + $0x10] sm:$0xff]
    %v43 = vld [vmem:[#allocation2 + $0x18] sm:$0xff]
    %v44 = vld [vmem:[#allocation2 + $0x20] sm:$0xff]
    %v45 = vld [vmem:[#allocation2 + $0x28] sm:$0xff]
    %v46 = vld [vmem:[#allocation2 + $0x30] sm:$0xff]
    %v47 = vld [vmem:[#allocation2 + $0x38] sm:$0xff]
    %v48 = vld [vmem:[#allocation5] sm:$0xff]
    %v49 = vld [vmem:[#allocation5 + $0x8] sm:$0xff]
    %v50 = vld [vmem:[#allocation5 + $0x10] sm:$0xff]
    %v51 = vld [vmem:[#allocation5 + $0x18] sm:$0xff]
    %v52 = vld [vmem:[#allocation5 + $0x20] sm:$0xff]
    %v53 = vld [vmem:[#allocation5 + $0x28] sm:$0xff]
    %v54 = vld [vmem:[#allocation5 + $0x30] sm:$0xff]
    %v55 = vld [vmem:[#allocation5 + $0x38] sm:$0xff]
    %v56 = vld [vmem:[#allocation5 + $0x40] sm:$0x1]
    %v57 = vld [vmem:[#allocation5 + $0x48] sm:$0xff]
    %v58 = vld [vmem:[#allocation5 + $0x50] sm:$0xff]
    %v59 = vld [vmem:[#allocation5 + $0x58] sm:$0xff]
    %v60 = vld [vmem:[#allocation5 + $0x60] sm:$0xff]
    %v61 = vld [vmem:[#allocation5 + $0x68] sm:$0xff]
    %v62 = vld [vmem:[#allocation5 + $0x70] sm:$0xff]
    %v63 = vld [vmem:[#allocation5 + $0x78] sm:$0xff]
    %v64 = vld [vmem:[#allocation5 + $0x80] sm:$0xff]
    %v65 = vld [vmem:[#allocation5 + $0x88] sm:$0xff]
    %v66 = vld [vmem:[#allocation5 + $0x90] sm:$0xff]
    %v67 = vld [vmem:[#allocation5 + $0x98] sm:$0xff]
    %v68 = vld [vmem:[#allocation5 + $0xa0] sm:$0xff]
    %v69 = vld [vmem:[#allocation5 + $0xa8] sm:$0x1]
    %v70 = vlaneseq
    %v71 = vshrl.u32 %v70, 7
    %v72 = vsub.s32 0, %v71
    %v73 = vrot.slane %v56, %v72
    %v74 = vxor.u32 %v73, 2147483648
    %v75 = vmul.f32 %v74, 1.442695
    %v76 = vpow.pop %v75
    %v77 = vadd.f32 %v76, 1.0
    %v78 = vrcp.pop %v77
    %v79 = vmul.f32 1.0, %v78
    %v80 = vtanh.pop %v73
    %82 = vrot.lane.b32.xlu0 %v80, 64
    %v83 = vpop.permute.xlu0 %82
    %v85 = vmul.f32 %v79, %v83
    %v86 = vtanh.pop %v85
    %88 = vrot.lane.b32.xlu0 %v86, 96
    %v89 = vpop.permute.xlu0 %88
    %v91 = vmul.f32 %v79, %v89
    %v93 = vcombine.high %v91, %v91
    %v95 = vunpack.c.l.s4 1966171168
    %v96 = vunpack.c.0.s8 %v95
    %v97 = vlaneseq
    %v98 = vshrl.u32 %v97, 7
    %v99 = vsub.s32 %v96, %v98
    %v100 = vrot.slane %v91, %v99
    %v102 = vunpack.c.l.s4 1966171168
    %v103 = vunpack.c.0.s8 %v102
    %v104 = vlaneseq
    %v105 = vshrl.u32 %v104, 7
    %v106 = vsub.s32 %v103, %v105
    %v107 = vrot.slane %v93, %v106
    %v108 = vcombine.high %v100, %v100
    %v109 = vcombine.high %v107, %v107
    %v111 = vunpack.c.l.s4 1966171168
    %v112 = vunpack.c.0.s8 %v111
    %v113 = vlaneseq
    %v114 = vshrl.u32 %v113, 7
    %v115 = vsub.s32 %v112, %v114
    %v116 = vrot.slane %v100, %v115
    %v118 = vunpack.c.l.s4 1966171168
    %v119 = vunpack.c.0.s8 %v118
    %v120 = vlaneseq
    %v121 = vshrl.u32 %v120, 7
    %v122 = vsub.s32 %v119, %v121
    %v123 = vrot.slane %v107, %v122
    %v125 = vunpack.c.l.s4 1966171168
    %v126 = vunpack.c.0.s8 %v125
    %v127 = vlaneseq
    %v128 = vshrl.u32 %v127, 7
    %v129 = vsub.s32 %v126, %v128
    %v130 = vrot.slane %v108, %v129
    %v132 = vunpack.c.l.s4 1966171168
    %v133 = vunpack.c.0.s8 %v132
    %v134 = vlaneseq
    %v135 = vshrl.u32 %v134, 7
    %v136 = vsub.s32 %v133, %v135
    %v137 = vrot.slane %v109, %v136
    %v138 = vcombine.high %v116, %v116
    %v139 = vcombine.high %v123, %v123
    %v140 = vcombine.high %v130, %v130
    %v141 = vcombine.high %v137, %v137
    %v142 = vlaneseq
    %v143 = vshrl.u32 %v142, 7
    %v144 = vsub.s32 0, %v143
    %v145 = vrot.slane %v116, %v144
    %v146 = vlaneseq
    %v147 = vshrl.u32 %v146, 7
    %v148 = vsub.s32 0, %v147
    %v149 = vrot.slane %v130, %v148
    %v150 = vlaneseq
    %v151 = vshrl.u32 %v150, 7
    %v152 = vsub.s32 0, %v151
    %v153 = vrot.slane %v138, %v152
    %v154 = vlaneseq
    %v155 = vshrl.u32 %v154, 7
    %v156 = vsub.s32 0, %v155
    %v157 = vrot.slane %v140, %v156
    %v158 = vlaneseq
    %v159 = vshrl.u32 %v158, 7
    %v160 = vsub.s32 0, %v159
    %v161 = vrot.slane %v123, %v160
    %v162 = vlaneseq
    %v163 = vshrl.u32 %v162, 7
    %v164 = vsub.s32 0, %v163
    %v165 = vrot.slane %v137, %v164
    %v166 = vlaneseq
    %v167 = vshrl.u32 %v166, 7
    %v168 = vsub.s32 0, %v167
    %v169 = vrot.slane %v139, %v168
    %v170 = vlaneseq
    %v171 = vshrl.u32 %v170, 7
    %v172 = vsub.s32 0, %v171
    %v173 = vrot.slane %v141, %v172
    %174 = vrot.lane.b32.xlu0 %v145, 32
    %v175 = vpop.permute.xlu0 %174
    %176 = vrot.lane.b32.xlu0 %v149, 32
    %v177 = vpop.permute.xlu0 %176
    %178 = vrot.lane.b32.xlu0 %v153, 32
    %v179 = vpop.permute.xlu0 %178
    %180 = vrot.lane.b32.xlu0 %v157, 32
    %v181 = vpop.permute.xlu0 %180
    %182 = vrot.lane.b32.xlu0 %v161, 32
    %v183 = vpop.permute.xlu0 %182
    %184 = vrot.lane.b32.xlu0 %v165, 32
    %v185 = vpop.permute.xlu0 %184
    %186 = vrot.lane.b32.xlu0 %v169, 32
    %v187 = vpop.permute.xlu0 %186
    %188 = vrot.lane.b32.xlu0 %v173, 32
    %v189 = vpop.permute.xlu0 %188
    %v198 = vmul.f32 %v40, %v175
    %v199 = vmul.f32 %v41, %v177
    %v200 = vmul.f32 %v42, %v179
    %v201 = vmul.f32 %v43, %v181
    %v202 = vmul.f32 %v44, %v183
    %v203 = vmul.f32 %v45, %v185
    %v204 = vmul.f32 %v46, %v187
    %v205 = vmul.f32 %v47, %v189
    %vm206 = vcmask 261120
    %v207 = vsel %vm206, %v198, 0.0
    %208 = vadd.xlane.f32.xlu0 %v207
    %v209 = vpop.xlane.xlu0 %208
    %v210 = vsel %vm206, %v199, 0.0
    %211 = vadd.xlane.f32.xlu0 %v210
    %v212 = vpop.xlane.xlu0 %211
    %v213 = vsel %vm206, %v200, 0.0
    %214 = vadd.xlane.f32.xlu0 %v213
    %v215 = vpop.xlane.xlu0 %214
    %v216 = vsel %vm206, %v201, 0.0
    %217 = vadd.xlane.f32.xlu0 %v216
    %v218 = vpop.xlane.xlu0 %217
    %v219 = vsel %vm206, %v202, 0.0
    %220 = vadd.xlane.f32.xlu0 %v219
    %v221 = vpop.xlane.xlu0 %220
    %v222 = vsel %vm206, %v203, 0.0
    %223 = vadd.xlane.f32.xlu0 %v222
    %v224 = vpop.xlane.xlu0 %223
    %v225 = vsel %vm206, %v204, 0.0
    %226 = vadd.xlane.f32.xlu0 %v225
    %v227 = vpop.xlane.xlu0 %226
    %v228 = vsel %vm206, %v205, 0.0
    %229 = vadd.xlane.f32.xlu0 %v228
    %v230 = vpop.xlane.xlu0 %229
    %v239 = vlaneseq
    %v240 = vand.u32 %v239, 127
    %v241 = vlaneseq
    %v242 = vshrl.u32 %v241, 7
    %v243 = vsub.s32 %v240, %v242
    %v244 = vrot.slane %v209, %v243
    %v245 = vlaneseq
    %v246 = vshrl.u32 %v245, 7
    %v247 = vsub.s32 %v240, %v246
    %v248 = vrot.slane %v212, %v247
    %v249 = vlaneseq
    %v250 = vshrl.u32 %v249, 7
    %v251 = vsub.s32 %v240, %v250
    %v252 = vrot.slane %v215, %v251
    %v253 = vlaneseq
    %v254 = vshrl.u32 %v253, 7
    %v255 = vsub.s32 %v240, %v254
    %v256 = vrot.slane %v218, %v255
    %v257 = vlaneseq
    %v258 = vshrl.u32 %v257, 7
    %v259 = vsub.s32 %v240, %v258
    %v260 = vrot.slane %v221, %v259
    %v261 = vlaneseq
    %v262 = vshrl.u32 %v261, 7
    %v263 = vsub.s32 %v240, %v262
    %v264 = vrot.slane %v224, %v263
    %v265 = vlaneseq
    %v266 = vshrl.u32 %v265, 7
    %v267 = vsub.s32 %v240, %v266
    %v268 = vrot.slane %v227, %v267
    %v269 = vlaneseq
    %v270 = vshrl.u32 %v269, 7
    %v271 = vsub.s32 %v240, %v270
    %v272 = vrot.slane %v230, %v271
    %vm273 = vcmask 1041409
    %v274 = vsel %vm273, %v248, %v244
    %vm275 = vcmask 1042434
    %v276 = vsel %vm275, %v252, %v274
    %vm277 = vcmask 1043459
    %v278 = vsel %vm277, %v256, %v276
    %vm279 = vcmask 1044484
    %v280 = vsel %vm279, %v260, %v278
    %vm281 = vcmask 1045509
    %v282 = vsel %vm281, %v264, %v280
    %vm283 = vcmask 1046534
    %v284 = vsel %vm283, %v268, %v282
    %vm285 = vcmask 1047559
    %v286 = vsel %vm285, %v272, %v284
    %vm288 = vcmask 64512
    %v289 = vsel %vm288, %v286, -inf
    %290 = vmax.xlane.f32.xlu0 %v289
    %v291 = vpop.xlane.xlu0 %290
    %v293 = vlaneseq
    %v294 = vshrl.u32 %v293, 7
    %v295 = vsub.s32 0, %v294
    %v296 = vrot.slane %v291, %v295
    %v297 = vlaneseq
    %v298 = vshrl.u32 %v297, 7
    %v299 = vsub.s32 1, %v298
    %v300 = vrot.slane %v291, %v299
    %v301 = vlaneseq
    %v302 = vshrl.u32 %v301, 7
    %v303 = vsub.s32 2, %v302
    %v304 = vrot.slane %v291, %v303
    %v305 = vlaneseq
    %v306 = vshrl.u32 %v305, 7
    %v307 = vsub.s32 3, %v306
    %v308 = vrot.slane %v291, %v307
    %v309 = vlaneseq
    %v310 = vshrl.u32 %v309, 7
    %v311 = vsub.s32 4, %v310
    %v312 = vrot.slane %v291, %v311
    %v313 = vlaneseq
    %v314 = vshrl.u32 %v313, 7
    %v315 = vsub.s32 5, %v314
    %v316 = vrot.slane %v291, %v315
    %v317 = vlaneseq
    %v318 = vshrl.u32 %v317, 7
    %v319 = vsub.s32 6, %v318
    %v320 = vrot.slane %v291, %v319
    %v321 = vlaneseq
    %v322 = vshrl.u32 %v321, 7
    %v323 = vsub.s32 7, %v322
    %v324 = vrot.slane %v291, %v323
    %v333 = vsub.f32 %v209, %v296
    %v334 = vsub.f32 %v212, %v300
    %v335 = vsub.f32 %v215, %v304
    %v336 = vsub.f32 %v218, %v308
    %v337 = vsub.f32 %v221, %v312
    %v338 = vsub.f32 %v224, %v316
    %v339 = vsub.f32 %v227, %v320
    %v340 = vsub.f32 %v230, %v324
    %v341 = vmul.f32 %v333, 1.442695
    %v342 = vpow.pop %v341
    %v343 = vmul.f32 %v334, 1.442695
    %v344 = vpow.pop %v343
    %v345 = vmul.f32 %v335, 1.442695
    %v346 = vpow.pop %v345
    %v347 = vmul.f32 %v336, 1.442695
    %v348 = vpow.pop %v347
    %v349 = vmul.f32 %v337, 1.442695
    %v350 = vpow.pop %v349
    %v351 = vmul.f32 %v338, 1.442695
    %v352 = vpow.pop %v351
    %v353 = vmul.f32 %v339, 1.442695
    %v354 = vpow.pop %v353
    %v355 = vmul.f32 %v340, 1.442695
    %v356 = vpow.pop %v355
    %365 = vset.pattern.permute.xlu0 0
    %366 = vperm.xlu0 %365, %v342
    %v367 = vpop.permute.xlu0 %366
    %368 = vset.pattern.permute.xlu0 0
    %369 = vperm.xlu0 %368, %v344
    %v370 = vpop.permute.xlu0 %369
    %371 = vset.pattern.permute.xlu0 0
    %372 = vperm.xlu0 %371, %v346
    %v373 = vpop.permute.xlu0 %372
    %374 = vset.pattern.permute.xlu0 0
    %375 = vperm.xlu0 %374, %v348
    %v376 = vpop.permute.xlu0 %375
    %377 = vset.pattern.permute.xlu0 0
    %378 = vperm.xlu0 %377, %v350
    %v379 = vpop.permute.xlu0 %378
    %380 = vset.pattern.permute.xlu0 0
    %381 = vperm.xlu0 %380, %v352
    %v382 = vpop.permute.xlu0 %381
    %383 = vset.pattern.permute.xlu0 0
    %384 = vperm.xlu0 %383, %v354
    %v385 = vpop.permute.xlu0 %384
    %386 = vset.pattern.permute.xlu0 0
    %387 = vperm.xlu0 %386, %v356
    %v388 = vpop.permute.xlu0 %387
    %v389 = vlaneseq
    %v390 = vshrl.u32 %v389, 7
    %v391 = vsub.s32 %v240, %v390
    %v392 = vrot.slane %v367, %v391
    %v393 = vlaneseq
    %v394 = vshrl.u32 %v393, 7
    %v395 = vsub.s32 %v240, %v394
    %v396 = vrot.slane %v370, %v395
    %v397 = vlaneseq
    %v398 = vshrl.u32 %v397, 7
    %v399 = vsub.s32 %v240, %v398
    %v400 = vrot.slane %v373, %v399
    %v401 = vlaneseq
    %v402 = vshrl.u32 %v401, 7
    %v403 = vsub.s32 %v240, %v402
    %v404 = vrot.slane %v376, %v403
    %v405 = vlaneseq
    %v406 = vshrl.u32 %v405, 7
    %v407 = vsub.s32 %v240, %v406
    %v408 = vrot.slane %v379, %v407
    %v409 = vlaneseq
    %v410 = vshrl.u32 %v409, 7
    %v411 = vsub.s32 %v240, %v410
    %v412 = vrot.slane %v382, %v411
    %v413 = vlaneseq
    %v414 = vshrl.u32 %v413, 7
    %v415 = vsub.s32 %v240, %v414
    %v416 = vrot.slane %v385, %v415
    %v417 = vlaneseq
    %v418 = vshrl.u32 %v417, 7
    %v419 = vsub.s32 %v240, %v418
    %v420 = vrot.slane %v388, %v419
    %v421 = vsel %vm273, %v396, %v392
    %v422 = vsel %vm275, %v400, %v421
    %v423 = vsel %vm277, %v404, %v422
    %v424 = vsel %vm279, %v408, %v423
    %v425 = vsel %vm281, %v412, %v424
    %v426 = vsel %vm283, %v416, %v425
    %v427 = vsel %vm285, %v420, %v426
    %v429 = vsel %vm288, %v427, 0.0
    %430 = vadd.xlane.f32.xlu0 %v429
    %v431 = vpop.xlane.xlu0 %430
    %v432 = vrcp.pop %v431
    %v434 = vlaneseq
    %v435 = vshrl.u32 %v434, 7
    %v436 = vsub.s32 0, %v435
    %v437 = vrot.slane %v432, %v436
    %v438 = vlaneseq
    %v439 = vshrl.u32 %v438, 7
    %v440 = vsub.s32 1, %v439
    %v441 = vrot.slane %v432, %v440
    %v442 = vlaneseq
    %v443 = vshrl.u32 %v442, 7
    %v444 = vsub.s32 2, %v443
    %v445 = vrot.slane %v432, %v444
    %v446 = vlaneseq
    %v447 = vshrl.u32 %v446, 7
    %v448 = vsub.s32 3, %v447
    %v449 = vrot.slane %v432, %v448
    %v450 = vlaneseq
    %v451 = vshrl.u32 %v450, 7
    %v452 = vsub.s32 4, %v451
    %v453 = vrot.slane %v432, %v452
    %v454 = vlaneseq
    %v455 = vshrl.u32 %v454, 7
    %v456 = vsub.s32 5, %v455
    %v457 = vrot.slane %v432, %v456
    %v458 = vlaneseq
    %v459 = vshrl.u32 %v458, 7
    %v460 = vsub.s32 6, %v459
    %v461 = vrot.slane %v432, %v460
    %v462 = vlaneseq
    %v463 = vshrl.u32 %v462, 7
    %v464 = vsub.s32 7, %v463
    %v465 = vrot.slane %v432, %v464
    %v474 = vmul.f32 %v342, %v437
    %v475 = vmul.f32 %v344, %v441
    %v476 = vmul.f32 %v346, %v445
    %v477 = vmul.f32 %v348, %v449
    %v478 = vmul.f32 %v350, %v453
    %v479 = vmul.f32 %v352, %v457
    %v480 = vmul.f32 %v354, %v461
    %v481 = vmul.f32 %v356, %v465
    %483 = vset.pattern.permute.xlu0 0
    %484 = vperm.xlu0 %483, %v474
    %v485 = vpop.permute.xlu0 %484
    %488 = vset.pattern.permute.xlu0 0
    %489 = vperm.xlu0 %488, %v475
    %v490 = vpop.permute.xlu0 %489
    %493 = vset.pattern.permute.xlu0 0
    %494 = vperm.xlu0 %493, %v476
    %v495 = vpop.permute.xlu0 %494
    %498 = vset.pattern.permute.xlu0 0
    %499 = vperm.xlu0 %498, %v477
    %v500 = vpop.permute.xlu0 %499
    %503 = vset.pattern.permute.xlu0 0
    %504 = vperm.xlu0 %503, %v478
    %v505 = vpop.permute.xlu0 %504
    %508 = vset.pattern.permute.xlu0 0
    %509 = vperm.xlu0 %508, %v479
    %v510 = vpop.permute.xlu0 %509
    %513 = vset.pattern.permute.xlu0 0
    %514 = vperm.xlu0 %513, %v480
    %v515 = vpop.permute.xlu0 %514
    %518 = vset.pattern.permute.xlu0 0
    %519 = vperm.xlu0 %518, %v481
    %v520 = vpop.permute.xlu0 %519
    %v522 = vmul.f32 %v485, %v40
    %v523 = vmul.f32 %v490, %v41
    %v524 = vmul.f32 %v495, %v42
    %v525 = vmul.f32 %v500, %v43
    %v526 = vmul.f32 %v505, %v44
    %v527 = vmul.f32 %v510, %v45
    %v528 = vmul.f32 %v515, %v46
    %v529 = vmul.f32 %v520, %v47
    %v530 = vsel %vm206, %v522, 0.0
    %v531 = vrot.slane %v530, 4
    %v532 = vadd.f32 %v530, %v531
    %v533 = vrot.slane %v532, 2
    %v534 = vadd.f32 %v532, %v533
    %v535 = vrot.slane %v534, 1
    %v536 = vadd.f32 %v534, %v535
    %v537 = vsel %vm206, %v523, 0.0
    %v538 = vrot.slane %v537, 4
    %v539 = vadd.f32 %v537, %v538
    %v540 = vrot.slane %v539, 2
    %v541 = vadd.f32 %v539, %v540
    %v542 = vrot.slane %v541, 1
    %v543 = vadd.f32 %v541, %v542
    %v544 = vsel %vm206, %v524, 0.0
    %v545 = vrot.slane %v544, 4
    %v546 = vadd.f32 %v544, %v545
    %v547 = vrot.slane %v546, 2
    %v548 = vadd.f32 %v546, %v547
    %v549 = vrot.slane %v548, 1
    %v550 = vadd.f32 %v548, %v549
    %v551 = vsel %vm206, %v525, 0.0
    %v552 = vrot.slane %v551, 4
    %v553 = vadd.f32 %v551, %v552
    %v554 = vrot.slane %v553, 2
    %v555 = vadd.f32 %v553, %v554
    %v556 = vrot.slane %v555, 1
    %v557 = vadd.f32 %v555, %v556
    %v558 = vsel %vm206, %v526, 0.0
    %v559 = vrot.slane %v558, 4
    %v560 = vadd.f32 %v558, %v559
    %v561 = vrot.slane %v560, 2
    %v562 = vadd.f32 %v560, %v561
    %v563 = vrot.slane %v562, 1
    %v564 = vadd.f32 %v562, %v563
    %v565 = vsel %vm206, %v527, 0.0
    %v566 = vrot.slane %v565, 4
    %v567 = vadd.f32 %v565, %v566
    %v568 = vrot.slane %v567, 2
    %v569 = vadd.f32 %v567, %v568
    %v570 = vrot.slane %v569, 1
    %v571 = vadd.f32 %v569, %v570
    %v572 = vsel %vm206, %v528, 0.0
    %v573 = vrot.slane %v572, 4
    %v574 = vadd.f32 %v572, %v573
    %v575 = vrot.slane %v574, 2
    %v576 = vadd.f32 %v574, %v575
    %v577 = vrot.slane %v576, 1
    %v578 = vadd.f32 %v576, %v577
    %v579 = vsel %vm206, %v529, 0.0
    %v580 = vrot.slane %v579, 4
    %v581 = vadd.f32 %v579, %v580
    %v582 = vrot.slane %v581, 2
    %v583 = vadd.f32 %v581, %v582
    %v584 = vrot.slane %v583, 1
    %v585 = vadd.f32 %v583, %v584
    %v594 = vsel %vm273, %v543, %v536
    %v595 = vsel %vm275, %v550, %v594
    %v596 = vsel %vm277, %v557, %v595
    %v597 = vsel %vm279, %v564, %v596
    %v598 = vsel %vm281, %v571, %v597
    %v599 = vsel %vm283, %v578, %v598
    %v600 = vsel %vm285, %v585, %v599
    %v601 = vsel %vm206, %v600, 0
    %603 = vmatprep.subr.mxu0 0.0
    %604 = vmatpush1.msra.mxu0 0.0
    %605 = vmatprep.subr.mxu0 0.0
    %606 = vmatpush1.msra.mxu0 0.0
    %607 = vmatprep.subr.mxu0 0.0
    %608 = vmatpush1.msra.mxu0 0.0
    %609 = vmatprep.subr.mxu0 0.0
    %610 = vmatpush1.msra.mxu0 0.0
    %611 = vmatprep.subr.mxu0 0.0
    %612 = vmatpush1.msra.mxu0 0.0
    %613 = vmatprep.subr.mxu0 0.0
    %614 = vmatpush1.msra.mxu0 0.0
    %615 = vmatprep.subr.mxu0 0.0
    %616 = vmatpush1.msra.mxu0 0.0
    %617 = vmatprep.subr.mxu0 0.0
    %618 = vmatpush1.msra.mxu0 0.0
    %619 = vmatprep.subr.mxu0 0.0
    %620 = vmatpush1.msra.mxu0 0.0
    %621 = vmatprep.subr.mxu0 0.0
    %622 = vmatpush1.msra.mxu0 0.0
    %623 = vmatprep.subr.mxu0 0.0
    %624 = vmatpush1.msra.mxu0 0.0
    %625 = vmatprep.subr.mxu0 0.0
    %626 = vmatpush1.msra.mxu0 0.0
    %627 = vmatprep.subr.mxu0 0.0
    %628 = vmatpush1.msra.mxu0 %v55
    %629 = vmatprep.subr.mxu0 0.0
    %630 = vmatpush1.msra.mxu0 %v54
    %631 = vmatprep.subr.mxu0 0.0
    %632 = vmatpush1.msra.mxu0 %v53
    %633 = vmatprep.subr.mxu0 0.0
    %634 = vmatpush1.msra.mxu0 %v52
    %635 = vmatprep.subr.mxu0 0.0
    %636 = vmatpush2.msra.mxu0 0.0
    %637 = vmatprep.subr.mxu0 0.0
    %638 = vmatpush2.msra.mxu0 0.0
    %639 = vmatprep.subr.mxu0 0.0
    %640 = vmatpush2.msra.mxu0 0.0
    %641 = vmatprep.subr.mxu0 0.0
    %642 = vmatpush2.msra.mxu0 0.0
    %643 = vmatprep.subr.mxu0 0.0
    %644 = vmatpush2.msra.mxu0 0.0
    %645 = vmatprep.subr.mxu0 0.0
    %646 = vmatpush2.msra.mxu0 0.0
    %647 = vmatprep.subr.mxu0 0.0
    %648 = vmatpush2.msra.mxu0 0.0
    %649 = vmatprep.subr.mxu0 0.0
    %650 = vmatpush2.msra.mxu0 0.0
    %651 = vmatprep.subr.mxu0 0.0
    %652 = vmatpush2.msra.mxu0 0.0
    %653 = vmatprep.subr.mxu0 0.0
    %654 = vmatpush2.msra.mxu0 0.0
    %655 = vmatprep.subr.mxu0 0.0
    %656 = vmatpush2.msra.mxu0 0.0
    %657 = vmatprep.subr.mxu0 0.0
    %658 = vmatpush2.msra.mxu0 0.0
    %659 = vmatprep.subr.mxu0 0.0
    %660 = vmatpush2.msra.mxu0 0.0
    %661 = vmatprep.subr.mxu0 0.0
    %662 = vmatpush2.msra.mxu0 0.0
    %663 = vmatprep.subr.mxu0 0.0
    %664 = vmatpush2.msra.mxu0 0.0
    %665 = vmatprep.subr.mxu0 0.0
    %666 = vmatpush2.msra.mxu0 0.0
    %667 = vmatprep.mubr.f32.mxu0 0.0
    %668 = vmatmul.mubr.f32.gmra.mxu0 %v601
    %v669 = vpop.f32.mrf.mxu0
    %v670 = vadd.f32 0.0, %v669
    %v671 = vpop.f32.mrf.mxu0
    %672 = vdwg.mxu0
    %673 = vrot.lane.b32.xlu0 %v91, 32
    %v674 = vpop.permute.xlu0 %673
    %v675 = vsel %vm206, %v674, 0
    %677 = vmatprep.subr.mxu0 0.0
    %678 = vmatpush1.msra.mxu0 0.0
    %679 = vmatprep.subr.mxu0 0.0
    %680 = vmatpush1.msra.mxu0 0.0
    %681 = vmatprep.subr.mxu0 0.0
    %682 = vmatpush1.msra.mxu0 0.0
    %683 = vmatprep.subr.mxu0 0.0
    %684 = vmatpush1.msra.mxu0 0.0
    %685 = vmatprep.subr.mxu0 0.0
    %686 = vmatpush1.msra.mxu0 0.0
    %687 = vmatprep.subr.mxu0 0.0
    %688 = vmatpush1.msra.mxu0 0.0
    %689 = vmatprep.subr.mxu0 0.0
    %690 = vmatpush1.msra.mxu0 0.0
    %691 = vmatprep.subr.mxu0 0.0
    %692 = vmatpush1.msra.mxu0 0.0
    %693 = vmatprep.subr.mxu0 0.0
    %694 = vmatpush1.msra.mxu0 0.0
    %695 = vmatprep.subr.mxu0 0.0
    %696 = vmatpush1.msra.mxu0 0.0
    %697 = vmatprep.subr.mxu0 0.0
    %698 = vmatpush1.msra.mxu0 0.0
    %699 = vmatprep.subr.mxu0 0.0
    %700 = vmatpush1.msra.mxu0 0.0
    %701 = vmatprep.subr.mxu0 0.0
    %702 = vmatpush1.msra.mxu0 %v51
    %703 = vmatprep.subr.mxu0 0.0
    %704 = vmatpush1.msra.mxu0 %v50
    %705 = vmatprep.subr.mxu0 0.0
    %706 = vmatpush1.msra.mxu0 %v49
    %707 = vmatprep.subr.mxu0 0.0
    %708 = vmatpush1.msra.mxu0 %v48
    %709 = vmatprep.subr.mxu0 0.0
    %710 = vmatpush2.msra.mxu0 0.0
    %711 = vmatprep.subr.mxu0 0.0
    %712 = vmatpush2.msra.mxu0 0.0
    %713 = vmatprep.subr.mxu0 0.0
    %714 = vmatpush2.msra.mxu0 0.0
    %715 = vmatprep.subr.mxu0 0.0
    %716 = vmatpush2.msra.mxu0 0.0
    %717 = vmatprep.subr.mxu0 0.0
    %718 = vmatpush2.msra.mxu0 0.0
    %719 = vmatprep.subr.mxu0 0.0
    %720 = vmatpush2.msra.mxu0 0.0
    %721 = vmatprep.subr.mxu0 0.0
    %722 = vmatpush2.msra.mxu0 0.0
    %723 = vmatprep.subr.mxu0 0.0
    %724 = vmatpush2.msra.mxu0 0.0
    %725 = vmatprep.subr.mxu0 0.0
    %726 = vmatpush2.msra.mxu0 0.0
    %727 = vmatprep.subr.mxu0 0.0
    %728 = vmatpush2.msra.mxu0 0.0
    %729 = vmatprep.subr.mxu0 0.0
    %730 = vmatpush2.msra.mxu0 0.0
    %731 = vmatprep.subr.mxu0 0.0
    %732 = vmatpush2.msra.mxu0 0.0
    %733 = vmatprep.subr.mxu0 0.0
    %734 = vmatpush2.msra.mxu0 0.0
    %735 = vmatprep.subr.mxu0 0.0
    %736 = vmatpush2.msra.mxu0 0.0
    %737 = vmatprep.subr.mxu0 0.0
    %738 = vmatpush2.msra.mxu0 0.0
    %739 = vmatprep.subr.mxu0 0.0
    %740 = vmatpush2.msra.mxu0 0.0
    %741 = vmatprep.mubr.f32.mxu0 0.0
    %742 = vmatmul.mubr.f32.gmra.mxu0 %v675
    %v743 = vpop.f32.mrf.mxu0
    %v744 = vadd.f32 %v670, %v743
    %v745 = vpop.f32.mrf.mxu0
    %746 = vdwg.mxu0
    %v747 = vadd.f32 %v744, %v73
    %v748 = vxor.u32 %v747, 2147483648
    %v749 = vmul.f32 %v748, 1.442695
    %v750 = vpow.pop %v749
    %v751 = vadd.f32 %v750, 1.0
    %v752 = vrcp.pop %v751
    %v753 = vmul.f32 1.0, %v752
    %v754 = vtanh.pop %v747
    %756 = vrot.lane.b32.xlu0 %v85, 32
    %v757 = vpop.permute.xlu0 %756
    %v759 = vmul.f32 %v753, %v757
    %761 = vrot.lane.b32.xlu0 %v754, 64
    %v762 = vpop.permute.xlu0 %761
    %v764 = vmul.f32 %v753, %v762
    %766 = vrot.lane.b32.xlu0 %v764, 32
    %v767 = vpop.permute.xlu0 %766
    %v769 = vadd.f32 %v759, %v767
    %v770 = vtanh.pop %v769
    %772 = vrot.lane.b32.xlu0 %v770, 64
    %v773 = vpop.permute.xlu0 %772
    %v775 = vmul.f32 %v753, %v773
    %v777 = vcombine.high %v775, %v775
    %v779 = vunpack.c.l.s4 1966171168
    %v780 = vunpack.c.0.s8 %v779
    %v781 = vlaneseq
    %v782 = vshrl.u32 %v781, 7
    %v783 = vsub.s32 %v780, %v782
    %v784 = vrot.slane %v775, %v783
    %v786 = vunpack.c.l.s4 1966171168
    %v787 = vunpack.c.0.s8 %v786
    %v788 = vlaneseq
    %v789 = vshrl.u32 %v788, 7
    %v790 = vsub.s32 %v787, %v789
    %v791 = vrot.slane %v777, %v790
    %v792 = vcombine.high %v784, %v784
    %v793 = vcombine.high %v791, %v791
    %v795 = vunpack.c.l.s4 1966171168
    %v796 = vunpack.c.0.s8 %v795
    %v797 = vlaneseq
    %v798 = vshrl.u32 %v797, 7
    %v799 = vsub.s32 %v796, %v798
    %v800 = vrot.slane %v784, %v799
    %v802 = vunpack.c.l.s4 1966171168
    %v803 = vunpack.c.0.s8 %v802
    %v804 = vlaneseq
    %v805 = vshrl.u32 %v804, 7
    %v806 = vsub.s32 %v803, %v805
    %v807 = vrot.slane %v791, %v806
    %v809 = vunpack.c.l.s4 1966171168
    %v810 = vunpack.c.0.s8 %v809
    %v811 = vlaneseq
    %v812 = vshrl.u32 %v811, 7
    %v813 = vsub.s32 %v810, %v812
    %v814 = vrot.slane %v792, %v813
    %v816 = vunpack.c.l.s4 1966171168
    %v817 = vunpack.c.0.s8 %v816
    %v818 = vlaneseq
    %v819 = vshrl.u32 %v818, 7
    %v820 = vsub.s32 %v817, %v819
    %v821 = vrot.slane %v793, %v820
    %v822 = vcombine.high %v800, %v800
    %v823 = vcombine.high %v807, %v807
    %v824 = vcombine.high %v814, %v814
    %v825 = vcombine.high %v821, %v821
    %v826 = vlaneseq
    %v827 = vshrl.u32 %v826, 7
    %v828 = vsub.s32 0, %v827
    %v829 = vrot.slane %v800, %v828
    %v830 = vlaneseq
    %v831 = vshrl.u32 %v830, 7
    %v832 = vsub.s32 0, %v831
    %v833 = vrot.slane %v814, %v832
    %v834 = vlaneseq
    %v835 = vshrl.u32 %v834, 7
    %v836 = vsub.s32 0, %v835
    %v837 = vrot.slane %v822, %v836
    %v838 = vlaneseq
    %v839 = vshrl.u32 %v838, 7
    %v840 = vsub.s32 0, %v839
    %v841 = vrot.slane %v824, %v840
    %v842 = vlaneseq
    %v843 = vshrl.u32 %v842, 7
    %v844 = vsub.s32 0, %v843
    %v845 = vrot.slane %v807, %v844
    %v846 = vlaneseq
    %v847 = vshrl.u32 %v846, 7
    %v848 = vsub.s32 0, %v847
    %v849 = vrot.slane %v821, %v848
    %v850 = vlaneseq
    %v851 = vshrl.u32 %v850, 7
    %v852 = vsub.s32 0, %v851
    %v853 = vrot.slane %v823, %v852
    %v854 = vlaneseq
    %v855 = vshrl.u32 %v854, 7
    %v856 = vsub.s32 0, %v855
    %v857 = vrot.slane %v825, %v856
    %858 = vrot.lane.b32.xlu0 %v829, 32
    %v859 = vpop.permute.xlu0 %858
    %860 = vrot.lane.b32.xlu0 %v833, 32
    %v861 = vpop.permute.xlu0 %860
    %862 = vrot.lane.b32.xlu0 %v837, 32
    %v863 = vpop.permute.xlu0 %862
    %864 = vrot.lane.b32.xlu0 %v841, 32
    %v865 = vpop.permute.xlu0 %864
    %866 = vrot.lane.b32.xlu0 %v845, 32
    %v867 = vpop.permute.xlu0 %866
    %868 = vrot.lane.b32.xlu0 %v849, 32
    %v869 = vpop.permute.xlu0 %868
    %870 = vrot.lane.b32.xlu0 %v853, 32
    %v871 = vpop.permute.xlu0 %870
    %872 = vrot.lane.b32.xlu0 %v857, 32
    %v873 = vpop.permute.xlu0 %872
    %v882 = vmul.f32 %v40, %v859
    %v883 = vmul.f32 %v41, %v861
    %v884 = vmul.f32 %v42, %v863
    %v885 = vmul.f32 %v43, %v865
    %v886 = vmul.f32 %v44, %v867
    %v887 = vmul.f32 %v45, %v869
    %v888 = vmul.f32 %v46, %v871
    %v889 = vmul.f32 %v47, %v873
    %v890 = vsel %vm206, %v882, 0.0
    %891 = vadd.xlane.f32.xlu0 %v890
    %v892 = vpop.xlane.xlu0 %891
    %v893 = vsel %vm206, %v883, 0.0
    %894 = vadd.xlane.f32.xlu0 %v893
    %v895 = vpop.xlane.xlu0 %894
    %v896 = vsel %vm206, %v884, 0.0
    %897 = vadd.xlane.f32.xlu0 %v896
    %v898 = vpop.xlane.xlu0 %897
    %v899 = vsel %vm206, %v885, 0.0
    %900 = vadd.xlane.f32.xlu0 %v899
    %v901 = vpop.xlane.xlu0 %900
    %v902 = vsel %vm206, %v886, 0.0
    %903 = vadd.xlane.f32.xlu0 %v902
    %v904 = vpop.xlane.xlu0 %903
    %v905 = vsel %vm206, %v887, 0.0
    %906 = vadd.xlane.f32.xlu0 %v905
    %v907 = vpop.xlane.xlu0 %906
    %v908 = vsel %vm206, %v888, 0.0
    %909 = vadd.xlane.f32.xlu0 %v908
    %v910 = vpop.xlane.xlu0 %909
    %v911 = vsel %vm206, %v889, 0.0
    %912 = vadd.xlane.f32.xlu0 %v911
    %v913 = vpop.xlane.xlu0 %912
    %v922 = vlaneseq
    %v923 = vshrl.u32 %v922, 7
    %v924 = vsub.s32 %v240, %v923
    %v925 = vrot.slane %v892, %v924
    %v926 = vlaneseq
    %v927 = vshrl.u32 %v926, 7
    %v928 = vsub.s32 %v240, %v927
    %v929 = vrot.slane %v895, %v928
    %v930 = vlaneseq
    %v931 = vshrl.u32 %v930, 7
    %v932 = vsub.s32 %v240, %v931
    %v933 = vrot.slane %v898, %v932
    %v934 = vlaneseq
    %v935 = vshrl.u32 %v934, 7
    %v936 = vsub.s32 %v240, %v935
    %v937 = vrot.slane %v901, %v936
    %v938 = vlaneseq
    %v939 = vshrl.u32 %v938, 7
    %v940 = vsub.s32 %v240, %v939
    %v941 = vrot.slane %v904, %v940
    %v942 = vlaneseq
    %v943 = vshrl.u32 %v942, 7
    %v944 = vsub.s32 %v240, %v943
    %v945 = vrot.slane %v907, %v944
    %v946 = vlaneseq
    %v947 = vshrl.u32 %v946, 7
    %v948 = vsub.s32 %v240, %v947
    %v949 = vrot.slane %v910, %v948
    %v950 = vlaneseq
    %v951 = vshrl.u32 %v950, 7
    %v952 = vsub.s32 %v240, %v951
    %v953 = vrot.slane %v913, %v952
    %v954 = vsel %vm273, %v929, %v925
    %v955 = vsel %vm275, %v933, %v954
    %v956 = vsel %vm277, %v937, %v955
    %v957 = vsel %vm279, %v941, %v956
    %v958 = vsel %vm281, %v945, %v957
    %v959 = vsel %vm283, %v949, %v958
    %v960 = vsel %vm285, %v953, %v959
    %v962 = vsel %vm288, %v960, -inf
    %963 = vmax.xlane.f32.xlu0 %v962
    %v964 = vpop.xlane.xlu0 %963
    %v966 = vlaneseq
    %v967 = vshrl.u32 %v966, 7
    %v968 = vsub.s32 0, %v967
    %v969 = vrot.slane %v964, %v968
    %v970 = vlaneseq
    %v971 = vshrl.u32 %v970, 7
    %v972 = vsub.s32 1, %v971
    %v973 = vrot.slane %v964, %v972
    %v974 = vlaneseq
    %v975 = vshrl.u32 %v974, 7
    %v976 = vsub.s32 2, %v975
    %v977 = vrot.slane %v964, %v976
    %v978 = vlaneseq
    %v979 = vshrl.u32 %v978, 7
    %v980 = vsub.s32 3, %v979
    %v981 = vrot.slane %v964, %v980
    %v982 = vlaneseq
    %v983 = vshrl.u32 %v982, 7
    %v984 = vsub.s32 4, %v983
    %v985 = vrot.slane %v964, %v984
    %v986 = vlaneseq
    %v987 = vshrl.u32 %v986, 7
    %v988 = vsub.s32 5, %v987
    %v989 = vrot.slane %v964, %v988
    %v990 = vlaneseq
    %v991 = vshrl.u32 %v990, 7
    %v992 = vsub.s32 6, %v991
    %v993 = vrot.slane %v964, %v992
    %v994 = vlaneseq
    %v995 = vshrl.u32 %v994, 7
    %v996 = vsub.s32 7, %v995
    %v997 = vrot.slane %v964, %v996
    %v1006 = vsub.f32 %v892, %v969
    %v1007 = vsub.f32 %v895, %v973
    %v1008 = vsub.f32 %v898, %v977
    %v1009 = vsub.f32 %v901, %v981
    %v1010 = vsub.f32 %v904, %v985
    %v1011 = vsub.f32 %v907, %v989
    %v1012 = vsub.f32 %v910, %v993
    %v1013 = vsub.f32 %v913, %v997
    %v1014 = vmul.f32 %v1006, 1.442695
    %v1015 = vpow.pop %v1014
    %v1016 = vmul.f32 %v1007, 1.442695
    %v1017 = vpow.pop %v1016
    %v1018 = vmul.f32 %v1008, 1.442695
    %v1019 = vpow.pop %v1018
    %v1020 = vmul.f32 %v1009, 1.442695
    %v1021 = vpow.pop %v1020
    %v1022 = vmul.f32 %v1010, 1.442695
    %v1023 = vpow.pop %v1022
    %v1024 = vmul.f32 %v1011, 1.442695
    %v1025 = vpow.pop %v1024
    %v1026 = vmul.f32 %v1012, 1.442695
    %v1027 = vpow.pop %v1026
    %v1028 = vmul.f32 %v1013, 1.442695
    %v1029 = vpow.pop %v1028
    %1038 = vset.pattern.permute.xlu0 0
    %1039 = vperm.xlu0 %1038, %v1015
    %v1040 = vpop.permute.xlu0 %1039
    %1041 = vset.pattern.permute.xlu0 0
    %1042 = vperm.xlu0 %1041, %v1017
    %v1043 = vpop.permute.xlu0 %1042
    %1044 = vset.pattern.permute.xlu0 0
    %1045 = vperm.xlu0 %1044, %v1019
    %v1046 = vpop.permute.xlu0 %1045
    %1047 = vset.pattern.permute.xlu0 0
    %1048 = vperm.xlu0 %1047, %v1021
    %v1049 = vpop.permute.xlu0 %1048
    %1050 = vset.pattern.permute.xlu0 0
    %1051 = vperm.xlu0 %1050, %v1023
    %v1052 = vpop.permute.xlu0 %1051
    %1053 = vset.pattern.permute.xlu0 0
    %1054 = vperm.xlu0 %1053, %v1025
    %v1055 = vpop.permute.xlu0 %1054
    %1056 = vset.pattern.permute.xlu0 0
    %1057 = vperm.xlu0 %1056, %v1027
    %v1058 = vpop.permute.xlu0 %1057
    %1059 = vset.pattern.permute.xlu0 0
    %1060 = vperm.xlu0 %1059, %v1029
    %v1061 = vpop.permute.xlu0 %1060
    %v1062 = vlaneseq
    %v1063 = vshrl.u32 %v1062, 7
    %v1064 = vsub.s32 %v240, %v1063
    %v1065 = vrot.slane %v1040, %v1064
    %v1066 = vlaneseq
    %v1067 = vshrl.u32 %v1066, 7
    %v1068 = vsub.s32 %v240, %v1067
    %v1069 = vrot.slane %v1043, %v1068
    %v1070 = vlaneseq
    %v1071 = vshrl.u32 %v1070, 7
    %v1072 = vsub.s32 %v240, %v1071
    %v1073 = vrot.slane %v1046, %v1072
    %v1074 = vlaneseq
    %v1075 = vshrl.u32 %v1074, 7
    %v1076 = vsub.s32 %v240, %v1075
    %v1077 = vrot.slane %v1049, %v1076
    %v1078 = vlaneseq
    %v1079 = vshrl.u32 %v1078, 7
    %v1080 = vsub.s32 %v240, %v1079
    %v1081 = vrot.slane %v1052, %v1080
    %v1082 = vlaneseq
    %v1083 = vshrl.u32 %v1082, 7
    %v1084 = vsub.s32 %v240, %v1083
    %v1085 = vrot.slane %v1055, %v1084
    %v1086 = vlaneseq
    %v1087 = vshrl.u32 %v1086, 7
    %v1088 = vsub.s32 %v240, %v1087
    %v1089 = vrot.slane %v1058, %v1088
    %v1090 = vlaneseq
    %v1091 = vshrl.u32 %v1090, 7
    %v1092 = vsub.s32 %v240, %v1091
    %v1093 = vrot.slane %v1061, %v1092
    %v1094 = vsel %vm273, %v1069, %v1065
    %v1095 = vsel %vm275, %v1073, %v1094
    %v1096 = vsel %vm277, %v1077, %v1095
    %v1097 = vsel %vm279, %v1081, %v1096
    %v1098 = vsel %vm281, %v1085, %v1097
    %v1099 = vsel %vm283, %v1089, %v1098
    %v1100 = vsel %vm285, %v1093, %v1099
    %v1102 = vsel %vm288, %v1100, 0.0
    %1103 = vadd.xlane.f32.xlu0 %v1102
    %v1104 = vpop.xlane.xlu0 %1103
    %v1105 = vrcp.pop %v1104
    %v1107 = vlaneseq
    %v1108 = vshrl.u32 %v1107, 7
    %v1109 = vsub.s32 0, %v1108
    %v1110 = vrot.slane %v1105, %v1109
    %v1111 = vlaneseq
    %v1112 = vshrl.u32 %v1111, 7
    %v1113 = vsub.s32 1, %v1112
    %v1114 = vrot.slane %v1105, %v1113
    %v1115 = vlaneseq
    %v1116 = vshrl.u32 %v1115, 7
    %v1117 = vsub.s32 2, %v1116
    %v1118 = vrot.slane %v1105, %v1117
    %v1119 = vlaneseq
    %v1120 = vshrl.u32 %v1119, 7
    %v1121 = vsub.s32 3, %v1120
    %v1122 = vrot.slane %v1105, %v1121
    %v1123 = vlaneseq
    %v1124 = vshrl.u32 %v1123, 7
    %v1125 = vsub.s32 4, %v1124
    %v1126 = vrot.slane %v1105, %v1125
    %v1127 = vlaneseq
    %v1128 = vshrl.u32 %v1127, 7
    %v1129 = vsub.s32 5, %v1128
    %v1130 = vrot.slane %v1105, %v1129
    %v1131 = vlaneseq
    %v1132 = vshrl.u32 %v1131, 7
    %v1133 = vsub.s32 6, %v1132
    %v1134 = vrot.slane %v1105, %v1133
    %v1135 = vlaneseq
    %v1136 = vshrl.u32 %v1135, 7
    %v1137 = vsub.s32 7, %v1136
    %v1138 = vrot.slane %v1105, %v1137
    %v1147 = vmul.f32 %v1015, %v1110
    %v1148 = vmul.f32 %v1017, %v1114
    %v1149 = vmul.f32 %v1019, %v1118
    %v1150 = vmul.f32 %v1021, %v1122
    %v1151 = vmul.f32 %v1023, %v1126
    %v1152 = vmul.f32 %v1025, %v1130
    %v1153 = vmul.f32 %v1027, %v1134
    %v1154 = vmul.f32 %v1029, %v1138
    %1156 = vset.pattern.permute.xlu0 0
    %1157 = vperm.xlu0 %1156, %v1147
    %v1158 = vpop.permute.xlu0 %1157
    %1161 = vset.pattern.permute.xlu0 0
    %1162 = vperm.xlu0 %1161, %v1148
    %v1163 = vpop.permute.xlu0 %1162
    %1166 = vset.pattern.permute.xlu0 0
    %1167 = vperm.xlu0 %1166, %v1149
    %v1168 = vpop.permute.xlu0 %1167
    %1171 = vset.pattern.permute.xlu0 0
    %1172 = vperm.xlu0 %1171, %v1150
    %v1173 = vpop.permute.xlu0 %1172
    %1176 = vset.pattern.permute.xlu0 0
    %1177 = vperm.xlu0 %1176, %v1151
    %v1178 = vpop.permute.xlu0 %1177
    %1181 = vset.pattern.permute.xlu0 0
    %1182 = vperm.xlu0 %1181, %v1152
    %v1183 = vpop.permute.xlu0 %1182
    %1186 = vset.pattern.permute.xlu0 0
    %1187 = vperm.xlu0 %1186, %v1153
    %v1188 = vpop.permute.xlu0 %1187
    %1191 = vset.pattern.permute.xlu0 0
    %1192 = vperm.xlu0 %1191, %v1154
    %v1193 = vpop.permute.xlu0 %1192
    %v1195 = vmul.f32 %v1158, %v40
    %v1196 = vmul.f32 %v1163, %v41
    %v1197 = vmul.f32 %v1168, %v42
    %v1198 = vmul.f32 %v1173, %v43
    %v1199 = vmul.f32 %v1178, %v44
    %v1200 = vmul.f32 %v1183, %v45
    %v1201 = vmul.f32 %v1188, %v46
    %v1202 = vmul.f32 %v1193, %v47
    %v1203 = vsel %vm206, %v1195, 0.0
    %v1204 = vrot.slane %v1203, 4
    %v1205 = vadd.f32 %v1203, %v1204
    %v1206 = vrot.slane %v1205, 2
    %v1207 = vadd.f32 %v1205, %v1206
    %v1208 = vrot.slane %v1207, 1
    %v1209 = vadd.f32 %v1207, %v1208
    %v1210 = vsel %vm206, %v1196, 0.0
    %v1211 = vrot.slane %v1210, 4
    %v1212 = vadd.f32 %v1210, %v1211
    %v1213 = vrot.slane %v1212, 2
    %v1214 = vadd.f32 %v1212, %v1213
    %v1215 = vrot.slane %v1214, 1
    %v1216 = vadd.f32 %v1214, %v1215
    %v1217 = vsel %vm206, %v1197, 0.0
    %v1218 = vrot.slane %v1217, 4
    %v1219 = vadd.f32 %v1217, %v1218
    %v1220 = vrot.slane %v1219, 2
    %v1221 = vadd.f32 %v1219, %v1220
    %v1222 = vrot.slane %v1221, 1
    %v1223 = vadd.f32 %v1221, %v1222
    %v1224 = vsel %vm206, %v1198, 0.0
    %v1225 = vrot.slane %v1224, 4
    %v1226 = vadd.f32 %v1224, %v1225
    %v1227 = vrot.slane %v1226, 2
    %v1228 = vadd.f32 %v1226, %v1227
    %v1229 = vrot.slane %v1228, 1
    %v1230 = vadd.f32 %v1228, %v1229
    %v1231 = vsel %vm206, %v1199, 0.0
    %v1232 = vrot.slane %v1231, 4
    %v1233 = vadd.f32 %v1231, %v1232
    %v1234 = vrot.slane %v1233, 2
    %v1235 = vadd.f32 %v1233, %v1234
    %v1236 = vrot.slane %v1235, 1
    %v1237 = vadd.f32 %v1235, %v1236
    %v1238 = vsel %vm206, %v1200, 0.0
    %v1239 = vrot.slane %v1238, 4
    %v1240 = vadd.f32 %v1238, %v1239
    %v1241 = vrot.slane %v1240, 2
    %v1242 = vadd.f32 %v1240, %v1241
    %v1243 = vrot.slane %v1242, 1
    %v1244 = vadd.f32 %v1242, %v1243
    %v1245 = vsel %vm206, %v1201, 0.0
    %v1246 = vrot.slane %v1245, 4
    %v1247 = vadd.f32 %v1245, %v1246
    %v1248 = vrot.slane %v1247, 2
    %v1249 = vadd.f32 %v1247, %v1248
    %v1250 = vrot.slane %v1249, 1
    %v1251 = vadd.f32 %v1249, %v1250
    %v1252 = vsel %vm206, %v1202, 0.0
    %v1253 = vrot.slane %v1252, 4
    %v1254 = vadd.f32 %v1252, %v1253
    %v1255 = vrot.slane %v1254, 2
    %v1256 = vadd.f32 %v1254, %v1255
    %v1257 = vrot.slane %v1256, 1
    %v1258 = vadd.f32 %v1256, %v1257
    %v1267 = vsel %vm273, %v1216, %v1209
    %v1268 = vsel %vm275, %v1223, %v1267
    %v1269 = vsel %vm277, %v1230, %v1268
    %v1270 = vsel %vm279, %v1237, %v1269
    %v1271 = vsel %vm281, %v1244, %v1270
    %v1272 = vsel %vm283, %v1251, %v1271
    %v1273 = vsel %vm285, %v1258, %v1272
    %v1274 = vsel %vm206, %v1273, 0
    %1276 = vmatprep.subr.mxu0 0.0
    %1277 = vmatpush1.msra.mxu0 0.0
    %1278 = vmatprep.subr.mxu0 0.0
    %1279 = vmatpush1.msra.mxu0 0.0
    %1280 = vmatprep.subr.mxu0 0.0
    %1281 = vmatpush1.msra.mxu0 0.0
    %1282 = vmatprep.subr.mxu0 0.0
    %1283 = vmatpush1.msra.mxu0 0.0
    %1284 = vmatprep.subr.mxu0 0.0
    %1285 = vmatpush1.msra.mxu0 0.0
    %1286 = vmatprep.subr.mxu0 0.0
    %1287 = vmatpush1.msra.mxu0 0.0
    %1288 = vmatprep.subr.mxu0 0.0
    %1289 = vmatpush1.msra.mxu0 0.0
    %1290 = vmatprep.subr.mxu0 0.0
    %1291 = vmatpush1.msra.mxu0 0.0
    %1292 = vmatprep.subr.mxu0 0.0
    %1293 = vmatpush1.msra.mxu0 0.0
    %1294 = vmatprep.subr.mxu0 0.0
    %1295 = vmatpush1.msra.mxu0 0.0
    %1296 = vmatprep.subr.mxu0 0.0
    %1297 = vmatpush1.msra.mxu0 0.0
    %1298 = vmatprep.subr.mxu0 0.0
    %1299 = vmatpush1.msra.mxu0 0.0
    %1300 = vmatprep.subr.mxu0 0.0
    %1301 = vmatpush1.msra.mxu0 %v55
    %1302 = vmatprep.subr.mxu0 0.0
    %1303 = vmatpush1.msra.mxu0 %v54
    %1304 = vmatprep.subr.mxu0 0.0
    %1305 = vmatpush1.msra.mxu0 %v53
    %1306 = vmatprep.subr.mxu0 0.0
    %1307 = vmatpush1.msra.mxu0 %v52
    %1308 = vmatprep.subr.mxu0 0.0
    %1309 = vmatpush2.msra.mxu0 0.0
    %1310 = vmatprep.subr.mxu0 0.0
    %1311 = vmatpush2.msra.mxu0 0.0
    %1312 = vmatprep.subr.mxu0 0.0
    %1313 = vmatpush2.msra.mxu0 0.0
    %1314 = vmatprep.subr.mxu0 0.0
    %1315 = vmatpush2.msra.mxu0 0.0
    %1316 = vmatprep.subr.mxu0 0.0
    %1317 = vmatpush2.msra.mxu0 0.0
    %1318 = vmatprep.subr.mxu0 0.0
    %1319 = vmatpush2.msra.mxu0 0.0
    %1320 = vmatprep.subr.mxu0 0.0
    %1321 = vmatpush2.msra.mxu0 0.0
    %1322 = vmatprep.subr.mxu0 0.0
    %1323 = vmatpush2.msra.mxu0 0.0
    %1324 = vmatprep.subr.mxu0 0.0
    %1325 = vmatpush2.msra.mxu0 0.0
    %1326 = vmatprep.subr.mxu0 0.0
    %1327 = vmatpush2.msra.mxu0 0.0
    %1328 = vmatprep.subr.mxu0 0.0
    %1329 = vmatpush2.msra.mxu0 0.0
    %1330 = vmatprep.subr.mxu0 0.0
    %1331 = vmatpush2.msra.mxu0 0.0
    %1332 = vmatprep.subr.mxu0 0.0
    %1333 = vmatpush2.msra.mxu0 0.0
    %1334 = vmatprep.subr.mxu0 0.0
    %1335 = vmatpush2.msra.mxu0 0.0
    %1336 = vmatprep.subr.mxu0 0.0
    %1337 = vmatpush2.msra.mxu0 0.0
    %1338 = vmatprep.subr.mxu0 0.0
    %1339 = vmatpush2.msra.mxu0 0.0
    %1340 = vmatprep.mubr.f32.mxu0 0.0
    %1341 = vmatmul.mubr.f32.gmra.mxu0 %v1274
    %v1342 = vpop.f32.mrf.mxu0
    %v1343 = vadd.f32 0.0, %v1342
    %v1344 = vpop.f32.mrf.mxu0
    %1345 = vdwg.mxu0
    %1346 = vrot.lane.b32.xlu0 %v775, 32
    %v1347 = vpop.permute.xlu0 %1346
    %v1348 = vsel %vm206, %v1347, 0
    %1350 = vmatprep.subr.mxu0 0.0
    %1351 = vmatpush1.msra.mxu0 0.0
    %1352 = vmatprep.subr.mxu0 0.0
    %1353 = vmatpush1.msra.mxu0 0.0
    %1354 = vmatprep.subr.mxu0 0.0
    %1355 = vmatpush1.msra.mxu0 0.0
    %1356 = vmatprep.subr.mxu0 0.0
    %1357 = vmatpush1.msra.mxu0 0.0
    %1358 = vmatprep.subr.mxu0 0.0
    %1359 = vmatpush1.msra.mxu0 0.0
    %1360 = vmatprep.subr.mxu0 0.0
    %1361 = vmatpush1.msra.mxu0 0.0
    %1362 = vmatprep.subr.mxu0 0.0
    %1363 = vmatpush1.msra.mxu0 0.0
    %1364 = vmatprep.subr.mxu0 0.0
    %1365 = vmatpush1.msra.mxu0 0.0
    %1366 = vmatprep.subr.mxu0 0.0
    %1367 = vmatpush1.msra.mxu0 0.0
    %1368 = vmatprep.subr.mxu0 0.0
    %1369 = vmatpush1.msra.mxu0 0.0
    %1370 = vmatprep.subr.mxu0 0.0
    %1371 = vmatpush1.msra.mxu0 0.0
    %1372 = vmatprep.subr.mxu0 0.0
    %1373 = vmatpush1.msra.mxu0 0.0
    %1374 = vmatprep.subr.mxu0 0.0
    %1375 = vmatpush1.msra.mxu0 %v51
    %1376 = vmatprep.subr.mxu0 0.0
    %1377 = vmatpush1.msra.mxu0 %v50
    %1378 = vmatprep.subr.mxu0 0.0
    %1379 = vmatpush1.msra.mxu0 %v49
    %1380 = vmatprep.subr.mxu0 0.0
    %1381 = vmatpush1.msra.mxu0 %v48
    %1382 = vmatprep.subr.mxu0 0.0
    %1383 = vmatpush2.msra.mxu0 0.0
    %1384 = vmatprep.subr.mxu0 0.0
    %1385 = vmatpush2.msra.mxu0 0.0
    %1386 = vmatprep.subr.mxu0 0.0
    %1387 = vmatpush2.msra.mxu0 0.0
    %1388 = vmatprep.subr.mxu0 0.0
    %1389 = vmatpush2.msra.mxu0 0.0
    %1390 = vmatprep.subr.mxu0 0.0
    %1391 = vmatpush2.msra.mxu0 0.0
    %1392 = vmatprep.subr.mxu0 0.0
    %1393 = vmatpush2.msra.mxu0 0.0
    %1394 = vmatprep.subr.mxu0 0.0
    %1395 = vmatpush2.msra.mxu0 0.0
    %1396 = vmatprep.subr.mxu0 0.0
    %1397 = vmatpush2.msra.mxu0 0.0
    %1398 = vmatprep.subr.mxu0 0.0
    %1399 = vmatpush2.msra.mxu0 0.0
    %1400 = vmatprep.subr.mxu0 0.0
    %1401 = vmatpush2.msra.mxu0 0.0
    %1402 = vmatprep.subr.mxu0 0.0
    %1403 = vmatpush2.msra.mxu0 0.0
    %1404 = vmatprep.subr.mxu0 0.0
    %1405 = vmatpush2.msra.mxu0 0.0
    %1406 = vmatprep.subr.mxu0 0.0
    %1407 = vmatpush2.msra.mxu0 0.0
    %1408 = vmatprep.subr.mxu0 0.0
    %1409 = vmatpush2.msra.mxu0 0.0
    %1410 = vmatprep.subr.mxu0 0.0
    %1411 = vmatpush2.msra.mxu0 0.0
    %1412 = vmatprep.subr.mxu0 0.0
    %1413 = vmatpush2.msra.mxu0 0.0
    %1414 = vmatprep.mubr.f32.mxu0 0.0
    %1415 = vmatmul.mubr.f32.gmra.mxu0 %v1348
    %v1416 = vpop.f32.mrf.mxu0
    %v1417 = vadd.f32 %v1343, %v1416
    %v1418 = vpop.f32.mrf.mxu0
    %1419 = vdwg.mxu0
    %v1420 = vadd.f32 %v1417, %v73
    %v1421 = vxor.u32 %v1420, 2147483648
    %v1422 = vmul.f32 %v1421, 1.442695
    %v1423 = vpow.pop %v1422
    %v1424 = vadd.f32 %v1423, 1.0
    %v1425 = vrcp.pop %v1424
    %v1426 = vmul.f32 1.0, %v1425
    %v1427 = vtanh.pop %v1420
    %v1428 = vmul.f32 %v1426, %v769
    %1430 = vrot.lane.b32.xlu0 %v1427, 64
    %v1431 = vpop.permute.xlu0 %1430
    %v1433 = vmul.f32 %v1426, %v1431
    %1435 = vrot.lane.b32.xlu0 %v1433, 32
    %v1436 = vpop.permute.xlu0 %1435
    %v1438 = vadd.f32 %v1428, %v1436
    %v1439 = vtanh.pop %v1438
    %1441 = vrot.lane.b32.xlu0 %v1439, 64
    %v1442 = vpop.permute.xlu0 %1441
    %v1444 = vmul.f32 %v1426, %v1442
    %v1446 = vcombine.high %v1444, %v1444
    %v1448 = vunpack.c.l.s4 1966171168
    %v1449 = vunpack.c.0.s8 %v1448
    %v1450 = vlaneseq
    %v1451 = vshrl.u32 %v1450, 7
    %v1452 = vsub.s32 %v1449, %v1451
    %v1453 = vrot.slane %v1444, %v1452
    %v1455 = vunpack.c.l.s4 1966171168
    %v1456 = vunpack.c.0.s8 %v1455
    %v1457 = vlaneseq
    %v1458 = vshrl.u32 %v1457, 7
    %v1459 = vsub.s32 %v1456, %v1458
    %v1460 = vrot.slane %v1446, %v1459
    %v1461 = vcombine.high %v1453, %v1453
    %v1462 = vcombine.high %v1460, %v1460
    %v1464 = vunpack.c.l.s4 1966171168
    %v1465 = vunpack.c.0.s8 %v1464
    %v1466 = vlaneseq
    %v1467 = vshrl.u32 %v1466, 7
    %v1468 = vsub.s32 %v1465, %v1467
    %v1469 = vrot.slane %v1453, %v1468
    %v1471 = vunpack.c.l.s4 1966171168
    %v1472 = vunpack.c.0.s8 %v1471
    %v1473 = vlaneseq
    %v1474 = vshrl.u32 %v1473, 7
    %v1475 = vsub.s32 %v1472, %v1474
    %v1476 = vrot.slane %v1460, %v1475
    %v1478 = vunpack.c.l.s4 1966171168
    %v1479 = vunpack.c.0.s8 %v1478
    %v1480 = vlaneseq
    %v1481 = vshrl.u32 %v1480, 7
    %v1482 = vsub.s32 %v1479, %v1481
    %v1483 = vrot.slane %v1461, %v1482
    %v1485 = vunpack.c.l.s4 1966171168
    %v1486 = vunpack.c.0.s8 %v1485
    %v1487 = vlaneseq
    %v1488 = vshrl.u32 %v1487, 7
    %v1489 = vsub.s32 %v1486, %v1488
    %v1490 = vrot.slane %v1462, %v1489
    %v1491 = vcombine.high %v1469, %v1469
    %v1492 = vcombine.high %v1476, %v1476
    %v1493 = vcombine.high %v1483, %v1483
    %v1494 = vcombine.high %v1490, %v1490
    %v1495 = vlaneseq
    %v1496 = vshrl.u32 %v1495, 7
    %v1497 = vsub.s32 0, %v1496
    %v1498 = vrot.slane %v1469, %v1497
    %v1499 = vlaneseq
    %v1500 = vshrl.u32 %v1499, 7
    %v1501 = vsub.s32 0, %v1500
    %v1502 = vrot.slane %v1483, %v1501
    %v1503 = vlaneseq
    %v1504 = vshrl.u32 %v1503, 7
    %v1505 = vsub.s32 0, %v1504
    %v1506 = vrot.slane %v1491, %v1505
    %v1507 = vlaneseq
    %v1508 = vshrl.u32 %v1507, 7
    %v1509 = vsub.s32 0, %v1508
    %v1510 = vrot.slane %v1493, %v1509
    %v1511 = vlaneseq
    %v1512 = vshrl.u32 %v1511, 7
    %v1513 = vsub.s32 0, %v1512
    %v1514 = vrot.slane %v1476, %v1513
    %v1515 = vlaneseq
    %v1516 = vshrl.u32 %v1515, 7
    %v1517 = vsub.s32 0, %v1516
    %v1518 = vrot.slane %v1490, %v1517
    %v1519 = vlaneseq
    %v1520 = vshrl.u32 %v1519, 7
    %v1521 = vsub.s32 0, %v1520
    %v1522 = vrot.slane %v1492, %v1521
    %v1523 = vlaneseq
    %v1524 = vshrl.u32 %v1523, 7
    %v1525 = vsub.s32 0, %v1524
    %v1526 = vrot.slane %v1494, %v1525
    %1527 = vrot.lane.b32.xlu0 %v1498, 32
    %v1528 = vpop.permute.xlu0 %1527
    %1529 = vrot.lane.b32.xlu0 %v1502, 32
    %v1530 = vpop.permute.xlu0 %1529
    %1531 = vrot.lane.b32.xlu0 %v1506, 32
    %v1532 = vpop.permute.xlu0 %1531
    %1533 = vrot.lane.b32.xlu0 %v1510, 32
    %v1534 = vpop.permute.xlu0 %1533
    %1535 = vrot.lane.b32.xlu0 %v1514, 32
    %v1536 = vpop.permute.xlu0 %1535
    %1537 = vrot.lane.b32.xlu0 %v1518, 32
    %v1538 = vpop.permute.xlu0 %1537
    %1539 = vrot.lane.b32.xlu0 %v1522, 32
    %v1540 = vpop.permute.xlu0 %1539
    %1541 = vrot.lane.b32.xlu0 %v1526, 32
    %v1542 = vpop.permute.xlu0 %1541
    %v1551 = vmul.f32 %v40, %v1528
    %v1552 = vmul.f32 %v41, %v1530
    %v1553 = vmul.f32 %v42, %v1532
    %v1554 = vmul.f32 %v43, %v1534
    %v1555 = vmul.f32 %v44, %v1536
    %v1556 = vmul.f32 %v45, %v1538
    %v1557 = vmul.f32 %v46, %v1540
    %v1558 = vmul.f32 %v47, %v1542
    %v1559 = vsel %vm206, %v1551, 0.0
    %1560 = vadd.xlane.f32.xlu0 %v1559
    %v1561 = vpop.xlane.xlu0 %1560
    %v1562 = vsel %vm206, %v1552, 0.0
    %1563 = vadd.xlane.f32.xlu0 %v1562
    %v1564 = vpop.xlane.xlu0 %1563
    %v1565 = vsel %vm206, %v1553, 0.0
    %1566 = vadd.xlane.f32.xlu0 %v1565
    %v1567 = vpop.xlane.xlu0 %1566
    %v1568 = vsel %vm206, %v1554, 0.0
    %1569 = vadd.xlane.f32.xlu0 %v1568
    %v1570 = vpop.xlane.xlu0 %1569
    %v1571 = vsel %vm206, %v1555, 0.0
    %1572 = vadd.xlane.f32.xlu0 %v1571
    %v1573 = vpop.xlane.xlu0 %1572
    %v1574 = vsel %vm206, %v1556, 0.0
    %1575 = vadd.xlane.f32.xlu0 %v1574
    %v1576 = vpop.xlane.xlu0 %1575
    %v1577 = vsel %vm206, %v1557, 0.0
    %1578 = vadd.xlane.f32.xlu0 %v1577
    %v1579 = vpop.xlane.xlu0 %1578
    %v1580 = vsel %vm206, %v1558, 0.0
    %1581 = vadd.xlane.f32.xlu0 %v1580
    %v1582 = vpop.xlane.xlu0 %1581
    %v1591 = vlaneseq
    %v1592 = vshrl.u32 %v1591, 7
    %v1593 = vsub.s32 %v240, %v1592
    %v1594 = vrot.slane %v1561, %v1593
    %v1595 = vlaneseq
    %v1596 = vshrl.u32 %v1595, 7
    %v1597 = vsub.s32 %v240, %v1596
    %v1598 = vrot.slane %v1564, %v1597
    %v1599 = vlaneseq
    %v1600 = vshrl.u32 %v1599, 7
    %v1601 = vsub.s32 %v240, %v1600
    %v1602 = vrot.slane %v1567, %v1601
    %v1603 = vlaneseq
    %v1604 = vshrl.u32 %v1603, 7
    %v1605 = vsub.s32 %v240, %v1604
    %v1606 = vrot.slane %v1570, %v1605
    %v1607 = vlaneseq
    %v1608 = vshrl.u32 %v1607, 7
    %v1609 = vsub.s32 %v240, %v1608
    %v1610 = vrot.slane %v1573, %v1609
    %v1611 = vlaneseq
    %v1612 = vshrl.u32 %v1611, 7
    %v1613 = vsub.s32 %v240, %v1612
    %v1614 = vrot.slane %v1576, %v1613
    %v1615 = vlaneseq
    %v1616 = vshrl.u32 %v1615, 7
    %v1617 = vsub.s32 %v240, %v1616
    %v1618 = vrot.slane %v1579, %v1617
    %v1619 = vlaneseq
    %v1620 = vshrl.u32 %v1619, 7
    %v1621 = vsub.s32 %v240, %v1620
    %v1622 = vrot.slane %v1582, %v1621
    %v1623 = vsel %vm273, %v1598, %v1594
    %v1624 = vsel %vm275, %v1602, %v1623
    %v1625 = vsel %vm277, %v1606, %v1624
    %v1626 = vsel %vm279, %v1610, %v1625
    %v1627 = vsel %vm281, %v1614, %v1626
    %v1628 = vsel %vm283, %v1618, %v1627
    %v1629 = vsel %vm285, %v1622, %v1628
    %v1631 = vsel %vm288, %v1629, -inf
    %1632 = vmax.xlane.f32.xlu0 %v1631
    %v1633 = vpop.xlane.xlu0 %1632
    %v1635 = vlaneseq
    %v1636 = vshrl.u32 %v1635, 7
    %v1637 = vsub.s32 0, %v1636
    %v1638 = vrot.slane %v1633, %v1637
    %v1639 = vlaneseq
    %v1640 = vshrl.u32 %v1639, 7
    %v1641 = vsub.s32 1, %v1640
    %v1642 = vrot.slane %v1633, %v1641
    %v1643 = vlaneseq
    %v1644 = vshrl.u32 %v1643, 7
    %v1645 = vsub.s32 2, %v1644
    %v1646 = vrot.slane %v1633, %v1645
    %v1647 = vlaneseq
    %v1648 = vshrl.u32 %v1647, 7
    %v1649 = vsub.s32 3, %v1648
    %v1650 = vrot.slane %v1633, %v1649
    %v1651 = vlaneseq
    %v1652 = vshrl.u32 %v1651, 7
    %v1653 = vsub.s32 4, %v1652
    %v1654 = vrot.slane %v1633, %v1653
    %v1655 = vlaneseq
    %v1656 = vshrl.u32 %v1655, 7
    %v1657 = vsub.s32 5, %v1656
    %v1658 = vrot.slane %v1633, %v1657
    %v1659 = vlaneseq
    %v1660 = vshrl.u32 %v1659, 7
    %v1661 = vsub.s32 6, %v1660
    %v1662 = vrot.slane %v1633, %v1661
    %v1663 = vlaneseq
    %v1664 = vshrl.u32 %v1663, 7
    %v1665 = vsub.s32 7, %v1664
    %v1666 = vrot.slane %v1633, %v1665
    %v1675 = vsub.f32 %v1561, %v1638
    %v1676 = vsub.f32 %v1564, %v1642
    %v1677 = vsub.f32 %v1567, %v1646
    %v1678 = vsub.f32 %v1570, %v1650
    %v1679 = vsub.f32 %v1573, %v1654
    %v1680 = vsub.f32 %v1576, %v1658
    %v1681 = vsub.f32 %v1579, %v1662
    %v1682 = vsub.f32 %v1582, %v1666
    %v1683 = vmul.f32 %v1675, 1.442695
    %v1684 = vpow.pop %v1683
    %v1685 = vmul.f32 %v1676, 1.442695
    %v1686 = vpow.pop %v1685
    %v1687 = vmul.f32 %v1677, 1.442695
    %v1688 = vpow.pop %v1687
    %v1689 = vmul.f32 %v1678, 1.442695
    %v1690 = vpow.pop %v1689
    %v1691 = vmul.f32 %v1679, 1.442695
    %v1692 = vpow.pop %v1691
    %v1693 = vmul.f32 %v1680, 1.442695
    %v1694 = vpow.pop %v1693
    %v1695 = vmul.f32 %v1681, 1.442695
    %v1696 = vpow.pop %v1695
    %v1697 = vmul.f32 %v1682, 1.442695
    %v1698 = vpow.pop %v1697
    %1707 = vset.pattern.permute.xlu0 0
    %1708 = vperm.xlu0 %1707, %v1684
    %v1709 = vpop.permute.xlu0 %1708
    %1710 = vset.pattern.permute.xlu0 0
    %1711 = vperm.xlu0 %1710, %v1686
    %v1712 = vpop.permute.xlu0 %1711
    %1713 = vset.pattern.permute.xlu0 0
    %1714 = vperm.xlu0 %1713, %v1688
    %v1715 = vpop.permute.xlu0 %1714
    %1716 = vset.pattern.permute.xlu0 0
    %1717 = vperm.xlu0 %1716, %v1690
    %v1718 = vpop.permute.xlu0 %1717
    %1719 = vset.pattern.permute.xlu0 0
    %1720 = vperm.xlu0 %1719, %v1692
    %v1721 = vpop.permute.xlu0 %1720
    %1722 = vset.pattern.permute.xlu0 0
    %1723 = vperm.xlu0 %1722, %v1694
    %v1724 = vpop.permute.xlu0 %1723
    %1725 = vset.pattern.permute.xlu0 0
    %1726 = vperm.xlu0 %1725, %v1696
    %v1727 = vpop.permute.xlu0 %1726
    %1728 = vset.pattern.permute.xlu0 0
    %1729 = vperm.xlu0 %1728, %v1698
    %v1730 = vpop.permute.xlu0 %1729
    %v1731 = vlaneseq
    %v1732 = vshrl.u32 %v1731, 7
    %v1733 = vsub.s32 %v240, %v1732
    %v1734 = vrot.slane %v1709, %v1733
    %v1735 = vlaneseq
    %v1736 = vshrl.u32 %v1735, 7
    %v1737 = vsub.s32 %v240, %v1736
    %v1738 = vrot.slane %v1712, %v1737
    %v1739 = vlaneseq
    %v1740 = vshrl.u32 %v1739, 7
    %v1741 = vsub.s32 %v240, %v1740
    %v1742 = vrot.slane %v1715, %v1741
    %v1743 = vlaneseq
    %v1744 = vshrl.u32 %v1743, 7
    %v1745 = vsub.s32 %v240, %v1744
    %v1746 = vrot.slane %v1718, %v1745
    %v1747 = vlaneseq
    %v1748 = vshrl.u32 %v1747, 7
    %v1749 = vsub.s32 %v240, %v1748
    %v1750 = vrot.slane %v1721, %v1749
    %v1751 = vlaneseq
    %v1752 = vshrl.u32 %v1751, 7
    %v1753 = vsub.s32 %v240, %v1752
    %v1754 = vrot.slane %v1724, %v1753
    %v1755 = vlaneseq
    %v1756 = vshrl.u32 %v1755, 7
    %v1757 = vsub.s32 %v240, %v1756
    %v1758 = vrot.slane %v1727, %v1757
    %v1759 = vlaneseq
    %v1760 = vshrl.u32 %v1759, 7
    %v1761 = vsub.s32 %v240, %v1760
    %v1762 = vrot.slane %v1730, %v1761
    %v1763 = vsel %vm273, %v1738, %v1734
    %v1764 = vsel %vm275, %v1742, %v1763
    %v1765 = vsel %vm277, %v1746, %v1764
    %v1766 = vsel %vm279, %v1750, %v1765
    %v1767 = vsel %vm281, %v1754, %v1766
    %v1768 = vsel %vm283, %v1758, %v1767
    %v1769 = vsel %vm285, %v1762, %v1768
    %v1771 = vsel %vm288, %v1769, 0.0
    %1772 = vadd.xlane.f32.xlu0 %v1771
    %v1773 = vpop.xlane.xlu0 %1772
    %v1774 = vrcp.pop %v1773
    %v1776 = vlaneseq
    %v1777 = vshrl.u32 %v1776, 7
    %v1778 = vsub.s32 0, %v1777
    %v1779 = vrot.slane %v1774, %v1778
    %v1780 = vlaneseq
    %v1781 = vshrl.u32 %v1780, 7
    %v1782 = vsub.s32 1, %v1781
    %v1783 = vrot.slane %v1774, %v1782
    %v1784 = vlaneseq
    %v1785 = vshrl.u32 %v1784, 7
    %v1786 = vsub.s32 2, %v1785
    %v1787 = vrot.slane %v1774, %v1786
    %v1788 = vlaneseq
    %v1789 = vshrl.u32 %v1788, 7
    %v1790 = vsub.s32 3, %v1789
    %v1791 = vrot.slane %v1774, %v1790
    %v1792 = vlaneseq
    %v1793 = vshrl.u32 %v1792, 7
    %v1794 = vsub.s32 4, %v1793
    %v1795 = vrot.slane %v1774, %v1794
    %v1796 = vlaneseq
    %v1797 = vshrl.u32 %v1796, 7
    %v1798 = vsub.s32 5, %v1797
    %v1799 = vrot.slane %v1774, %v1798
    %v1800 = vlaneseq
    %v1801 = vshrl.u32 %v1800, 7
    %v1802 = vsub.s32 6, %v1801
    %v1803 = vrot.slane %v1774, %v1802
    %v1804 = vlaneseq
    %v1805 = vshrl.u32 %v1804, 7
    %v1806 = vsub.s32 7, %v1805
    %v1807 = vrot.slane %v1774, %v1806
    %v1816 = vmul.f32 %v1684, %v1779
    %v1817 = vmul.f32 %v1686, %v1783
    %v1818 = vmul.f32 %v1688, %v1787
    %v1819 = vmul.f32 %v1690, %v1791
    %v1820 = vmul.f32 %v1692, %v1795
    %v1821 = vmul.f32 %v1694, %v1799
    %v1822 = vmul.f32 %v1696, %v1803
    %v1823 = vmul.f32 %v1698, %v1807
    %1825 = vset.pattern.permute.xlu0 0
    %1826 = vperm.xlu0 %1825, %v1816
    %v1827 = vpop.permute.xlu0 %1826
    %1830 = vset.pattern.permute.xlu0 0
    %1831 = vperm.xlu0 %1830, %v1817
    %v1832 = vpop.permute.xlu0 %1831
    %1835 = vset.pattern.permute.xlu0 0
    %1836 = vperm.xlu0 %1835, %v1818
    %v1837 = vpop.permute.xlu0 %1836
    %1840 = vset.pattern.permute.xlu0 0
    %1841 = vperm.xlu0 %1840, %v1819
    %v1842 = vpop.permute.xlu0 %1841
    %1845 = vset.pattern.permute.xlu0 0
    %1846 = vperm.xlu0 %1845, %v1820
    %v1847 = vpop.permute.xlu0 %1846
    %1850 = vset.pattern.permute.xlu0 0
    %1851 = vperm.xlu0 %1850, %v1821
    %v1852 = vpop.permute.xlu0 %1851
    %1855 = vset.pattern.permute.xlu0 0
    %1856 = vperm.xlu0 %1855, %v1822
    %v1857 = vpop.permute.xlu0 %1856
    %1860 = vset.pattern.permute.xlu0 0
    %1861 = vperm.xlu0 %1860, %v1823
    %v1862 = vpop.permute.xlu0 %1861
    %v1864 = vmul.f32 %v1827, %v40
    %v1865 = vmul.f32 %v1832, %v41
    %v1866 = vmul.f32 %v1837, %v42
    %v1867 = vmul.f32 %v1842, %v43
    %v1868 = vmul.f32 %v1847, %v44
    %v1869 = vmul.f32 %v1852, %v45
    %v1870 = vmul.f32 %v1857, %v46
    %v1871 = vmul.f32 %v1862, %v47
    %v1872 = vsel %vm206, %v1864, 0.0
    %v1873 = vrot.slane %v1872, 4
    %v1874 = vadd.f32 %v1872, %v1873
    %v1875 = vrot.slane %v1874, 2
    %v1876 = vadd.f32 %v1874, %v1875
    %v1877 = vrot.slane %v1876, 1
    %v1878 = vadd.f32 %v1876, %v1877
    %v1879 = vsel %vm206, %v1865, 0.0
    %v1880 = vrot.slane %v1879, 4
    %v1881 = vadd.f32 %v1879, %v1880
    %v1882 = vrot.slane %v1881, 2
    %v1883 = vadd.f32 %v1881, %v1882
    %v1884 = vrot.slane %v1883, 1
    %v1885 = vadd.f32 %v1883, %v1884
    %v1886 = vsel %vm206, %v1866, 0.0
    %v1887 = vrot.slane %v1886, 4
    %v1888 = vadd.f32 %v1886, %v1887
    %v1889 = vrot.slane %v1888, 2
    %v1890 = vadd.f32 %v1888, %v1889
    %v1891 = vrot.slane %v1890, 1
    %v1892 = vadd.f32 %v1890, %v1891
    %v1893 = vsel %vm206, %v1867, 0.0
    %v1894 = vrot.slane %v1893, 4
    %v1895 = vadd.f32 %v1893, %v1894
    %v1896 = vrot.slane %v1895, 2
    %v1897 = vadd.f32 %v1895, %v1896
    %v1898 = vrot.slane %v1897, 1
    %v1899 = vadd.f32 %v1897, %v1898
    %v1900 = vsel %vm206, %v1868, 0.0
    %v1901 = vrot.slane %v1900, 4
    %v1902 = vadd.f32 %v1900, %v1901
    %v1903 = vrot.slane %v1902, 2
    %v1904 = vadd.f32 %v1902, %v1903
    %v1905 = vrot.slane %v1904, 1
    %v1906 = vadd.f32 %v1904, %v1905
    %v1907 = vsel %vm206, %v1869, 0.0
    %v1908 = vrot.slane %v1907, 4
    %v1909 = vadd.f32 %v1907, %v1908
    %v1910 = vrot.slane %v1909, 2
    %v1911 = vadd.f32 %v1909, %v1910
    %v1912 = vrot.slane %v1911, 1
    %v1913 = vadd.f32 %v1911, %v1912
    %v1914 = vsel %vm206, %v1870, 0.0
    %v1915 = vrot.slane %v1914, 4
    %v1916 = vadd.f32 %v1914, %v1915
    %v1917 = vrot.slane %v1916, 2
    %v1918 = vadd.f32 %v1916, %v1917
    %v1919 = vrot.slane %v1918, 1
    %v1920 = vadd.f32 %v1918, %v1919
    %v1921 = vsel %vm206, %v1871, 0.0
    %v1922 = vrot.slane %v1921, 4
    %v1923 = vadd.f32 %v1921, %v1922
    %v1924 = vrot.slane %v1923, 2
    %v1925 = vadd.f32 %v1923, %v1924
    %v1926 = vrot.slane %v1925, 1
    %v1927 = vadd.f32 %v1925, %v1926
    %v1936 = vsel %vm273, %v1885, %v1878
    %v1937 = vsel %vm275, %v1892, %v1936
    %v1938 = vsel %vm277, %v1899, %v1937
    %v1939 = vsel %vm279, %v1906, %v1938
    %v1940 = vsel %vm281, %v1913, %v1939
    %v1941 = vsel %vm283, %v1920, %v1940
    %v1942 = vsel %vm285, %v1927, %v1941
    %v1943 = vsel %vm206, %v1942, 0
    %1945 = vmatprep.subr.mxu0 0.0
    %1946 = vmatpush1.msra.mxu0 0.0
    %1947 = vmatprep.subr.mxu0 0.0
    %1948 = vmatpush1.msra.mxu0 0.0
    %1949 = vmatprep.subr.mxu0 0.0
    %1950 = vmatpush1.msra.mxu0 0.0
    %1951 = vmatprep.subr.mxu0 0.0
    %1952 = vmatpush1.msra.mxu0 0.0
    %1953 = vmatprep.subr.mxu0 0.0
    %1954 = vmatpush1.msra.mxu0 0.0
    %1955 = vmatprep.subr.mxu0 0.0
    %1956 = vmatpush1.msra.mxu0 0.0
    %1957 = vmatprep.subr.mxu0 0.0
    %1958 = vmatpush1.msra.mxu0 0.0
    %1959 = vmatprep.subr.mxu0 0.0
    %1960 = vmatpush1.msra.mxu0 0.0
    %1961 = vmatprep.subr.mxu0 0.0
    %1962 = vmatpush1.msra.mxu0 0.0
    %1963 = vmatprep.subr.mxu0 0.0
    %1964 = vmatpush1.msra.mxu0 0.0
    %1965 = vmatprep.subr.mxu0 0.0
    %1966 = vmatpush1.msra.mxu0 0.0
    %1967 = vmatprep.subr.mxu0 0.0
    %1968 = vmatpush1.msra.mxu0 0.0
    %1969 = vmatprep.subr.mxu0 0.0
    %1970 = vmatpush1.msra.mxu0 %v68
    %1971 = vmatprep.subr.mxu0 0.0
    %1972 = vmatpush1.msra.mxu0 %v67
    %1973 = vmatprep.subr.mxu0 0.0
    %1974 = vmatpush1.msra.mxu0 %v66
    %1975 = vmatprep.subr.mxu0 0.0
    %1976 = vmatpush1.msra.mxu0 %v65
    %1977 = vmatprep.subr.mxu0 0.0
    %1978 = vmatpush2.msra.mxu0 0.0
    %1979 = vmatprep.subr.mxu0 0.0
    %1980 = vmatpush2.msra.mxu0 0.0
    %1981 = vmatprep.subr.mxu0 0.0
    %1982 = vmatpush2.msra.mxu0 0.0
    %1983 = vmatprep.subr.mxu0 0.0
    %1984 = vmatpush2.msra.mxu0 0.0
    %1985 = vmatprep.subr.mxu0 0.0
    %1986 = vmatpush2.msra.mxu0 0.0
    %1987 = vmatprep.subr.mxu0 0.0
    %1988 = vmatpush2.msra.mxu0 0.0
    %1989 = vmatprep.subr.mxu0 0.0
    %1990 = vmatpush2.msra.mxu0 0.0
    %1991 = vmatprep.subr.mxu0 0.0
    %1992 = vmatpush2.msra.mxu0 0.0
    %1993 = vmatprep.subr.mxu0 0.0
    %1994 = vmatpush2.msra.mxu0 0.0
    %1995 = vmatprep.subr.mxu0 0.0
    %1996 = vmatpush2.msra.mxu0 0.0
    %1997 = vmatprep.subr.mxu0 0.0
    %1998 = vmatpush2.msra.mxu0 0.0
    %1999 = vmatprep.subr.mxu0 0.0
    %2000 = vmatpush2.msra.mxu0 0.0
    %2001 = vmatprep.subr.mxu0 0.0
    %2002 = vmatpush2.msra.mxu0 0.0
    %2003 = vmatprep.subr.mxu0 0.0
    %2004 = vmatpush2.msra.mxu0 0.0
    %2005 = vmatprep.subr.mxu0 0.0
    %2006 = vmatpush2.msra.mxu0 0.0
    %2007 = vmatprep.subr.mxu0 0.0
    %2008 = vmatpush2.msra.mxu0 0.0
    %2009 = vmatprep.mubr.f32.mxu0 0.0
    %2010 = vmatmul.mubr.f32.gmra.mxu0 %v1943
    %v2011 = vpop.f32.mrf.mxu0
    %v2012 = vadd.f32 0.0, %v2011
    %v2013 = vpop.f32.mrf.mxu0
    %2014 = vdwg.mxu0
    %2015 = vrot.lane.b32.xlu0 %v1444, 32
    %v2016 = vpop.permute.xlu0 %2015
    %v2017 = vsel %vm206, %v2016, 0
    %2019 = vmatprep.subr.mxu0 0.0
    %2020 = vmatpush1.msra.mxu0 0.0
    %2021 = vmatprep.subr.mxu0 0.0
    %2022 = vmatpush1.msra.mxu0 0.0
    %2023 = vmatprep.subr.mxu0 0.0
    %2024 = vmatpush1.msra.mxu0 0.0
    %2025 = vmatprep.subr.mxu0 0.0
    %2026 = vmatpush1.msra.mxu0 0.0
    %2027 = vmatprep.subr.mxu0 0.0
    %2028 = vmatpush1.msra.mxu0 0.0
    %2029 = vmatprep.subr.mxu0 0.0
    %2030 = vmatpush1.msra.mxu0 0.0
    %2031 = vmatprep.subr.mxu0 0.0
    %2032 = vmatpush1.msra.mxu0 0.0
    %2033 = vmatprep.subr.mxu0 0.0
    %2034 = vmatpush1.msra.mxu0 0.0
    %2035 = vmatprep.subr.mxu0 0.0
    %2036 = vmatpush1.msra.mxu0 0.0
    %2037 = vmatprep.subr.mxu0 0.0
    %2038 = vmatpush1.msra.mxu0 0.0
    %2039 = vmatprep.subr.mxu0 0.0
    %2040 = vmatpush1.msra.mxu0 0.0
    %2041 = vmatprep.subr.mxu0 0.0
    %2042 = vmatpush1.msra.mxu0 0.0
    %2043 = vmatprep.subr.mxu0 0.0
    %2044 = vmatpush1.msra.mxu0 %v64
    %2045 = vmatprep.subr.mxu0 0.0
    %2046 = vmatpush1.msra.mxu0 %v63
    %2047 = vmatprep.subr.mxu0 0.0
    %2048 = vmatpush1.msra.mxu0 %v62
    %2049 = vmatprep.subr.mxu0 0.0
    %2050 = vmatpush1.msra.mxu0 %v61
    %2051 = vmatprep.subr.mxu0 0.0
    %2052 = vmatpush2.msra.mxu0 0.0
    %2053 = vmatprep.subr.mxu0 0.0
    %2054 = vmatpush2.msra.mxu0 0.0
    %2055 = vmatprep.subr.mxu0 0.0
    %2056 = vmatpush2.msra.mxu0 0.0
    %2057 = vmatprep.subr.mxu0 0.0
    %2058 = vmatpush2.msra.mxu0 0.0
    %2059 = vmatprep.subr.mxu0 0.0
    %2060 = vmatpush2.msra.mxu0 0.0
    %2061 = vmatprep.subr.mxu0 0.0
    %2062 = vmatpush2.msra.mxu0 0.0
    %2063 = vmatprep.subr.mxu0 0.0
    %2064 = vmatpush2.msra.mxu0 0.0
    %2065 = vmatprep.subr.mxu0 0.0
    %2066 = vmatpush2.msra.mxu0 0.0
    %2067 = vmatprep.subr.mxu0 0.0
    %2068 = vmatpush2.msra.mxu0 0.0
    %2069 = vmatprep.subr.mxu0 0.0
    %2070 = vmatpush2.msra.mxu0 0.0
    %2071 = vmatprep.subr.mxu0 0.0
    %2072 = vmatpush2.msra.mxu0 0.0
    %2073 = vmatprep.subr.mxu0 0.0
    %2074 = vmatpush2.msra.mxu0 0.0
    %2075 = vmatprep.subr.mxu0 0.0
    %2076 = vmatpush2.msra.mxu0 0.0
    %2077 = vmatprep.subr.mxu0 0.0
    %2078 = vmatpush2.msra.mxu0 0.0
    %2079 = vmatprep.subr.mxu0 0.0
    %2080 = vmatpush2.msra.mxu0 0.0
    %2081 = vmatprep.subr.mxu0 0.0
    %2082 = vmatpush2.msra.mxu0 0.0
    %2083 = vmatprep.mubr.f32.mxu0 0.0
    %2084 = vmatmul.mubr.f32.gmra.mxu0 %v2017
    %v2085 = vpop.f32.mrf.mxu0
    %v2086 = vadd.f32 %v2012, %v2085
    %v2087 = vpop.f32.mrf.mxu0
    %2088 = vdwg.mxu0
    %v2089 = vlaneseq
    %v2090 = vshrl.u32 %v2089, 7
    %v2091 = vsub.s32 0, %v2090
    %v2092 = vrot.slane %v69, %v2091
    %v2093 = vadd.f32 %v2086, %v2092
    %v2095 = vcombine.high %v2093, %v2093
    %v2097 = vunpack.c.l.s4 1966171168
    %v2098 = vunpack.c.0.s8 %v2097
    %v2099 = vlaneseq
    %v2100 = vshrl.u32 %v2099, 7
    %v2101 = vsub.s32 %v2098, %v2100
    %v2102 = vrot.slane %v2093, %v2101
    %v2104 = vunpack.c.l.s4 1966171168
    %v2105 = vunpack.c.0.s8 %v2104
    %v2106 = vlaneseq
    %v2107 = vshrl.u32 %v2106, 7
    %v2108 = vsub.s32 %v2105, %v2107
    %v2109 = vrot.slane %v2095, %v2108
    %v2110 = vcombine.high %v2102, %v2102
    %v2111 = vcombine.high %v2109, %v2109
    %v2113 = vunpack.c.l.s4 1966171168
    %v2114 = vunpack.c.0.s8 %v2113
    %v2115 = vlaneseq
    %v2116 = vshrl.u32 %v2115, 7
    %v2117 = vsub.s32 %v2114, %v2116
    %v2118 = vrot.slane %v2102, %v2117
    %v2120 = vunpack.c.l.s4 1966171168
    %v2121 = vunpack.c.0.s8 %v2120
    %v2122 = vlaneseq
    %v2123 = vshrl.u32 %v2122, 7
    %v2124 = vsub.s32 %v2121, %v2123
    %v2125 = vrot.slane %v2109, %v2124
    %v2127 = vunpack.c.l.s4 1966171168
    %v2128 = vunpack.c.0.s8 %v2127
    %v2129 = vlaneseq
    %v2130 = vshrl.u32 %v2129, 7
    %v2131 = vsub.s32 %v2128, %v2130
    %v2132 = vrot.slane %v2110, %v2131
    %v2134 = vunpack.c.l.s4 1966171168
    %v2135 = vunpack.c.0.s8 %v2134
    %v2136 = vlaneseq
    %v2137 = vshrl.u32 %v2136, 7
    %v2138 = vsub.s32 %v2135, %v2137
    %v2139 = vrot.slane %v2111, %v2138
    %v2140 = vcombine.high %v2118, %v2118
    %v2141 = vcombine.high %v2125, %v2125
    %v2142 = vcombine.high %v2132, %v2132
    %v2143 = vcombine.high %v2139, %v2139
    %v2144 = vlaneseq
    %v2145 = vshrl.u32 %v2144, 7
    %v2146 = vsub.s32 0, %v2145
    %v2147 = vrot.slane %v2118, %v2146
    %v2148 = vlaneseq
    %v2149 = vshrl.u32 %v2148, 7
    %v2150 = vsub.s32 0, %v2149
    %v2151 = vrot.slane %v2132, %v2150
    %v2152 = vlaneseq
    %v2153 = vshrl.u32 %v2152, 7
    %v2154 = vsub.s32 0, %v2153
    %v2155 = vrot.slane %v2140, %v2154
    %v2156 = vlaneseq
    %v2157 = vshrl.u32 %v2156, 7
    %v2158 = vsub.s32 0, %v2157
    %v2159 = vrot.slane %v2142, %v2158
    %v2160 = vlaneseq
    %v2161 = vshrl.u32 %v2160, 7
    %v2162 = vsub.s32 0, %v2161
    %v2163 = vrot.slane %v2125, %v2162
    %v2164 = vlaneseq
    %v2165 = vshrl.u32 %v2164, 7
    %v2166 = vsub.s32 0, %v2165
    %v2167 = vrot.slane %v2139, %v2166
    %v2168 = vlaneseq
    %v2169 = vshrl.u32 %v2168, 7
    %v2170 = vsub.s32 0, %v2169
    %v2171 = vrot.slane %v2141, %v2170
    %v2172 = vlaneseq
    %v2173 = vshrl.u32 %v2172, 7
    %v2174 = vsub.s32 0, %v2173
    %v2175 = vrot.slane %v2143, %v2174
    %v2185 = vsel %vm206, %v40, 0
    %v2188 = vsel %vm206, %v41, 0
    %v2191 = vsel %vm206, %v42, 0
    %v2194 = vsel %vm206, %v43, 0
    %v2197 = vsel %vm206, %v44, 0
    %v2200 = vsel %vm206, %v45, 0
    %v2203 = vsel %vm206, %v46, 0
    %v2206 = vsel %vm206, %v47, 0
    %2208 = vmatprep.subr.mxu0 0.0
    %2209 = vmatpush1.msra.mxu0 0.0
    %2210 = vmatprep.subr.mxu0 0.0
    %2211 = vmatpush1.msra.mxu0 0.0
    %2212 = vmatprep.subr.mxu0 0.0
    %2213 = vmatpush1.msra.mxu0 0.0
    %2214 = vmatprep.subr.mxu0 0.0
    %2215 = vmatpush1.msra.mxu0 0.0
    %2216 = vmatprep.subr.mxu0 0.0
    %2217 = vmatpush1.msra.mxu0 0.0
    %2218 = vmatprep.subr.mxu0 0.0
    %2219 = vmatpush1.msra.mxu0 0.0
    %2220 = vmatprep.subr.mxu0 0.0
    %2221 = vmatpush1.msra.mxu0 0.0
    %2222 = vmatprep.subr.mxu0 0.0
    %2223 = vmatpush1.msra.mxu0 0.0
    %2224 = vmatprep.subr.mxu0 0.0
    %2225 = vmatpush1.msra.mxu0 0.0
    %2226 = vmatprep.subr.mxu0 0.0
    %2227 = vmatpush1.msra.mxu0 0.0
    %2228 = vmatprep.subr.mxu0 0.0
    %2229 = vmatpush1.msra.mxu0 0.0
    %2230 = vmatprep.subr.mxu0 0.0
    %2231 = vmatpush1.msra.mxu0 0.0
    %2232 = vmatprep.subr.mxu0 0.0
    %2233 = vmatpush1.msra.mxu0 %v60
    %2234 = vmatprep.subr.mxu0 0.0
    %2235 = vmatpush1.msra.mxu0 %v59
    %2236 = vmatprep.subr.mxu0 0.0
    %2237 = vmatpush1.msra.mxu0 %v58
    %2238 = vmatprep.subr.mxu0 0.0
    %2239 = vmatpush1.msra.mxu0 %v57
    %2240 = vmatprep.subr.mxu0 0.0
    %2241 = vmatpush2.msra.mxu0 0.0
    %2242 = vmatprep.subr.mxu0 0.0
    %2243 = vmatpush2.msra.mxu0 0.0
    %2244 = vmatprep.subr.mxu0 0.0
    %2245 = vmatpush2.msra.mxu0 0.0
    %2246 = vmatprep.subr.mxu0 0.0
    %2247 = vmatpush2.msra.mxu0 0.0
    %2248 = vmatprep.subr.mxu0 0.0
    %2249 = vmatpush2.msra.mxu0 0.0
    %2250 = vmatprep.subr.mxu0 0.0
    %2251 = vmatpush2.msra.mxu0 0.0
    %2252 = vmatprep.subr.mxu0 0.0
    %2253 = vmatpush2.msra.mxu0 0.0
    %2254 = vmatprep.subr.mxu0 0.0
    %2255 = vmatpush2.msra.mxu0 0.0
    %2256 = vmatprep.subr.mxu0 0.0
    %2257 = vmatpush2.msra.mxu0 0.0
    %2258 = vmatprep.subr.mxu0 0.0
    %2259 = vmatpush2.msra.mxu0 0.0
    %2260 = vmatprep.subr.mxu0 0.0
    %2261 = vmatpush2.msra.mxu0 0.0
    %2262 = vmatprep.subr.mxu0 0.0
    %2263 = vmatpush2.msra.mxu0 0.0
    %2264 = vmatprep.subr.mxu0 0.0
    %2265 = vmatpush2.msra.mxu0 0.0
    %2266 = vmatprep.subr.mxu0 0.0
    %2267 = vmatpush2.msra.mxu0 0.0
    %2268 = vmatprep.subr.mxu0 0.0
    %2269 = vmatpush2.msra.mxu0 0.0
    %2270 = vmatprep.subr.mxu0 0.0
    %2271 = vmatpush2.msra.mxu0 0.0
    %2272 = vmatprep.mubr.f32.mxu0 0.0
    %2273 = vmatmul.mubr.f32.gmra.mxu0 %v2185
    %v2274 = vpop.f32.mrf.mxu0
    %v2275 = vadd.f32 %v2147, %v2274
    %v2276 = vpop.f32.mrf.mxu0
    %2277 = vmatprep.mubr.f32.mxu0 0.0
    %2278 = vmatmul.mubr.f32.gmra.mxu0 %v2188
    %v2279 = vpop.f32.mrf.mxu0
    %v2280 = vadd.f32 %v2151, %v2279
    %v2281 = vpop.f32.mrf.mxu0
    %2282 = vmatprep.mubr.f32.mxu0 0.0
    %2283 = vmatmul.mubr.f32.gmra.mxu0 %v2191
    %v2284 = vpop.f32.mrf.mxu0
    %v2285 = vadd.f32 %v2155, %v2284
    %v2286 = vpop.f32.mrf.mxu0
    %2287 = vmatprep.mubr.f32.mxu0 0.0
    %2288 = vmatmul.mubr.f32.gmra.mxu0 %v2194
    %v2289 = vpop.f32.mrf.mxu0
    %v2290 = vadd.f32 %v2159, %v2289
    %v2291 = vpop.f32.mrf.mxu0
    %2292 = vmatprep.mubr.f32.mxu0 0.0
    %2293 = vmatmul.mubr.f32.gmra.mxu0 %v2197
    %v2294 = vpop.f32.mrf.mxu0
    %v2295 = vadd.f32 %v2163, %v2294
    %v2296 = vpop.f32.mrf.mxu0
    %2297 = vmatprep.mubr.f32.mxu0 0.0
    %2298 = vmatmul.mubr.f32.gmra.mxu0 %v2200
    %v2299 = vpop.f32.mrf.mxu0
    %v2300 = vadd.f32 %v2167, %v2299
    %v2301 = vpop.f32.mrf.mxu0
    %2302 = vmatprep.mubr.f32.mxu0 0.0
    %2303 = vmatmul.mubr.f32.gmra.mxu0 %v2203
    %v2304 = vpop.f32.mrf.mxu0
    %v2305 = vadd.f32 %v2171, %v2304
    %v2306 = vpop.f32.mrf.mxu0
    %2307 = vmatprep.mubr.f32.mxu0 0.0
    %2308 = vmatmul.mubr.f32.gmra.mxu0 %v2206
    %v2309 = vpop.f32.mrf.mxu0
    %v2310 = vadd.f32 %v2175, %v2309
    %v2311 = vpop.f32.mrf.mxu0
    %2312 = vdwg.mxu0
    %vm2313 = vcmp.ge.f32.partialorder %v2275, 0.0
    %vm2314 = vcmp.ge.f32.partialorder %v2280, 0.0
    %vm2315 = vcmp.ge.f32.partialorder %v2285, 0.0
    %vm2316 = vcmp.ge.f32.partialorder %v2290, 0.0
    %vm2317 = vcmp.ge.f32.partialorder %v2295, 0.0
    %vm2318 = vcmp.ge.f32.partialorder %v2300, 0.0
    %vm2319 = vcmp.ge.f32.partialorder %v2305, 0.0
    %vm2320 = vcmp.ge.f32.partialorder %v2310, 0.0
    %v2321 = vmul.f32 %v2275, 0.01
    %v2322 = vmul.f32 %v2280, 0.01
    %v2323 = vmul.f32 %v2285, 0.01
    %v2324 = vmul.f32 %v2290, 0.01
    %v2325 = vmul.f32 %v2295, 0.01
    %v2326 = vmul.f32 %v2300, 0.01
    %v2327 = vmul.f32 %v2305, 0.01
    %v2328 = vmul.f32 %v2310, 0.01
    %v2329 = vsel %vm2313, %v2275, %v2321
    %v2330 = vsel %vm2314, %v2280, %v2322
    %v2331 = vsel %vm2315, %v2285, %v2323
    %v2332 = vsel %vm2316, %v2290, %v2324
    %v2333 = vsel %vm2317, %v2295, %v2325
    %v2334 = vsel %vm2318, %v2300, %v2326
    %v2335 = vsel %vm2319, %v2305, %v2327
    %v2336 = vsel %vm2320, %v2310, %v2328
    %2337 = vst.msk [vmem:[#allocation7] sm:$0xff] %vm206, %v2329
    %2338 = vst.msk [vmem:[#allocation7 + $0x8] sm:$0xff] %vm206, %v2330
    %2339 = vst.msk [vmem:[#allocation7 + $0x10] sm:$0xff] %vm206, %v2331
    %2340 = vst.msk [vmem:[#allocation7 + $0x18] sm:$0xff] %vm206, %v2332
    %2341 = vst.msk [vmem:[#allocation7 + $0x20] sm:$0xff] %vm206, %v2333
    %2342 = vst.msk [vmem:[#allocation7 + $0x28] sm:$0xff] %vm206, %v2334
    %2343 = vst.msk [vmem:[#allocation7 + $0x30] sm:$0xff] %vm206, %v2335
    %2344 = vst.msk [vmem:[#allocation7 + $0x38] sm:$0xff] %vm206, %v2336
    // Predicated region
    $region18: #{tpu_custom_call.1} parent=1 // pred_check
      _
    $region19: #{tpu_custom_call.1} parent=1 // pred_check_branch
      %2346 = sbr.rel (0) target = $region21
    $region20: #{tpu_custom_call.1} parent=1 // pred_region
      %s2348 = ssub.s32 1024, 1024
      %2349 = vsyncadd [#allocation4], %s2348
      %s2350 = sshll.u32 [#allocation7], 4
      %s2351 = int_to_ptr.vmem [resolvable:$true] %s2350
      %2356 = dma.vmem_to_hbm [thread:$0]  %s2351, 1024, %s2, [#allocation4], 128, 128, 8
    $region21: #{tpu_custom_call.1} parent=1 // pred_fallthru
      _
    // Predicated region
    $region22: #{tpu_custom_call.1} parent=1 // pred_check
      _
    $region23: #{tpu_custom_call.1} parent=1 // pred_check_branch
      %2358 = sbr.rel (0) target = $region25
    $region24: #{tpu_custom_call.1} parent=1 // pred_region
      %2359 = dma.done [#allocation4], 1024
    $region25: #{tpu_custom_call.1} parent=1 // pred_fallthru
      _
    %2360 = vsyncpa [#allocation3], 1
    %2361 = vsyncpa [#allocation6], 1
    %2362 = vsyncpa [#allocation4], 1

</llo_original>
